<compile_context>
chip_gen: v7x
topology: tpu7x:2x2x1
jax: 0.10.0
libtpu: 0.0.40
codegen_flags: <defaults>
</compile_context>

<pallas_src>
import functools

import jax
import jax.numpy as jnp
from jax import lax
from jax.experimental import pallas as pl
from jax.experimental.pallas import tpu as pltpu

_NEG = -1e30  # large finite negative for masking (avoids inf - inf -> NaN)


def _flash_mha_kernel(xq_ref, xkv_ref, wq_ref, wk_ref, wv_ref, wp_ref, bp_ref,
                      o_ref, m_scr, l_scr, acc_scr, *, n_head):
    qi = pl.program_id(1)
    ki = pl.program_id(2)
    nk = pl.num_programs(2)

    tq = xq_ref.shape[1]
    tk = xkv_ref.shape[1]
    C = xq_ref.shape[2]
    hs = C // n_head

    @pl.when(ki == 0)
    def _init():
        m_scr[...] = jnp.full_like(m_scr, _NEG)
        l_scr[...] = jnp.zeros_like(l_scr)
        acc_scr[...] = jnp.zeros_like(acc_scr)

    # Causal tile skip: the kv tile is fully masked iff its first column index is
    # beyond the last row index of this q tile.
    @pl.when(ki * tk < (qi + 1) * tq)
    def _compute():
        xq = xq_ref[0]    # (tq, C) bf16
        xkv = xkv_ref[0]  # (tk, C) bf16

        # Fused projections: one full-width MXU matmul each.
        # Wq is pre-scaled by n_embd**-0.5 in the wrapper (free scale folding).
        q = jnp.dot(xq, wq_ref[...], preferred_element_type=jnp.float32)   # (tq, C)
        k = jnp.dot(xkv, wk_ref[...], preferred_element_type=jnp.float32)  # (tk, C)
        v = jnp.dot(xkv, wv_ref[...], preferred_element_type=jnp.float32)  # (tk, C)

        # Head-major bf16 views for batched per-head MXU matmuls.
        qh = jnp.transpose(q.astype(jnp.bfloat16).reshape(tq, n_head, hs), (1, 0, 2))
        kh = jnp.transpose(k.astype(jnp.bfloat16).reshape(tk, n_head, hs), (1, 0, 2))
        vh = jnp.transpose(v.astype(jnp.bfloat16).reshape(tk, n_head, hs), (1, 0, 2))

        # Scores for all heads at once: (n_head, tq, tk), f32 accumulation.
        s = jnp.einsum("hqd,hkd->hqk", qh, kh, preferred_element_type=jnp.float32)

        # Causal mask on global indices; large finite negative (not -inf).
        row = qi * tq + lax.broadcasted_iota(jnp.int32, (tq, tk), 0)
        col = ki * tk + lax.broadcasted_iota(jnp.int32, (tq, tk), 1)
        s = jnp.where((col <= row)[None, :, :], s, _NEG)

        # Online softmax update (stats in f32).
        m_prev = m_scr[...]
        m_new = jnp.maximum(m_prev, jnp.max(s, axis=-1, keepdims=True))
        alpha = jnp.exp(m_prev - m_new)
        p = jnp.exp(s - m_new)
        l_scr[...] = alpha * l_scr[...] + jnp.sum(p, axis=-1, keepdims=True)
        pv = jnp.einsum("hqk,hkd->hqd", p.astype(jnp.bfloat16), vh,
                        preferred_element_type=jnp.float32)
        acc_scr[...] = alpha * acc_scr[...] + pv
        m_scr[...] = m_new
        # TODO(synk): attention-weight dropout skipped (eval-mode identity).

    @pl.when(ki == nk - 1)
    def _finalize():
        inv_l = pl.reciprocal(l_scr[...], approx=True)   # EUP slot, frees the VPU
        out_h = acc_scr[...] * inv_l                     # (n_head, tq, hs) f32
        # Heads -> lane-dense (tq, C) slab (replaces the old per-head concat).
        sa = jnp.transpose(out_h, (1, 0, 2)).reshape(tq, C).astype(jnp.bfloat16)
        out = jnp.dot(sa, wp_ref[...], preferred_element_type=jnp.float32) + bp_ref[...]
        # TODO(synk): output dropout skipped (eval-mode identity).
        o_ref[0] = out.astype(o_ref.dtype)


def _pick_tile(T):
    # Prefer 256-wide tiles (v6e/v7x MXU), then 128 (v5e), then smaller divisors.
    for t in (256, 128, 64, 32, 16, 8):
        if T % t == 0:
            return t
    return T  # T not a multiple of 8: fall back to one full-extent block


def multi_head_attention(x, wq, wk, wv, proj_w, proj_b, *, tq=None, tk=None):
    """x: (B, T, C) f32; wq/wk/wv: (n_head, C, head_size) (W.T per head);
    proj_w: (C, C) PyTorch layout (out, in); proj_b: (C,)."""
    B, T, C = x.shape
    n_head, _, hs = wq.shape
    assert n_head * hs == C

    tq = _pick_tile(T) if tq is None else tq
    tk = _pick_tile(T) if tk is None else tk
    assert T % tq == 0 and T % tk == 0

    # Reference quirk: scale = t_to_q.weight.shape[1] ** -0.5 == n_embd ** -0.5.
    scale = float(C) ** -0.5

    def fuse(w):  # (n_head, C, hs) -> (C, n_head*hs) with head-blocked columns
        return jnp.transpose(w, (1, 0, 2)).reshape(C, n_head * hs)

    wq_all = (fuse(wq) * scale).astype(jnp.bfloat16)   # scale folded into Wq
    wk_all = fuse(wk).astype(jnp.bfloat16)
    wv_all = fuse(wv).astype(jnp.bfloat16)
    wp_t = proj_w.T.astype(jnp.bfloat16)               # so the kernel does sa @ Wp^T
    bp = proj_b.reshape(1, C).astype(jnp.float32)      # bias added in f32
    x_bf16 = x.astype(jnp.bfloat16)

    kernel = functools.partial(_flash_mha_kernel, n_head=n_head)

    return pl.pallas_call(
        kernel,
        out_shape=jax.ShapeDtypeStruct((B, T, C), x.dtype),
        grid_spec=pltpu.PrefetchScalarGridSpec(
            num_scalar_prefetch=0,
            grid=(B, T // tq, T // tk),   # kv (reduction) axis last
            in_specs=[
                pl.BlockSpec((1, tq, C), lambda b, qi, ki: (b, qi, 0)),   # x (q rows)
                pl.BlockSpec((1, tk, C), lambda b, qi, ki: (b, ki, 0)),   # x (kv rows)
                # Constant block index -> weights are DMA'd once, not per grid step.
                pl.BlockSpec((C, C), lambda b, qi, ki: (0, 0)),           # Wq (pre-scaled)
                pl.BlockSpec((C, C), lambda b, qi, ki: (0, 0)),           # Wk
                pl.BlockSpec((C, C), lambda b, qi, ki: (0, 0)),           # Wv
                pl.BlockSpec((C, C), lambda b, qi, ki: (0, 0)),           # Wp^T
                pl.BlockSpec((1, C), lambda b, qi, ki: (0, 0)),           # proj bias
            ],
            out_specs=pl.BlockSpec((1, tq, C), lambda b, qi, ki: (b, qi, 0)),
            scratch_shapes=[
                pltpu.VMEM((n_head, tq, 1), jnp.float32),   # m (running max)
                pltpu.VMEM((n_head, tq, 1), jnp.float32),   # l (running denom)
                pltpu.VMEM((n_head, tq, hs), jnp.float32),  # acc (unnormalized out)
            ],
        ),
        compiler_params=pltpu.CompilerParams(
            dimension_semantics=("parallel", "parallel", "arbitrary"),
            vmem_limit_bytes=48 * 1024 * 1024,
        ),
    )(x_bf16, x_bf16, wq_all, wk_all, wv_all, wp_t, bp)


def reference(x, wq, wk, wv, proj_w, proj_b):
    """Pure-JAX f32 reference matching the PyTorch forward (eval mode)."""
    B, T, C = x.shape
    n_head = wq.shape[0]
    scale = C ** -0.5   # matches the PyTorch module (weight.shape[1] == n_embd)
    mask = jnp.tril(jnp.ones((T, T), dtype=bool))
    heads = []
    for h in range(n_head):
        q = x @ wq[h]
        k = x @ wk[h]
        v = x @ wv[h]
        s = jnp.einsum("btd,bsd->bts", q, k) * scale
        s = jnp.where(mask[None], s, -jnp.inf)
        w = jax.nn.softmax(s, axis=-1)
        heads.append(w @ v)
    sa = jnp.concatenate(heads, axis=-1)
    return sa @ proj_w.T + proj_b


if __name__ == "__main__":
    # Small, self-consistent sizes: n_embd = n_head * head_size.
    B, T = 2, 16
    n_head, head_size = 4, 8
    n_embd = n_head * head_size  # 32

    key = jax.random.PRNGKey(0)
    kx, kq, kk, kv, kw, kb = jax.random.split(key, 6)

    x = jax.random.normal(kx, (B, T, n_embd), dtype=jnp.float32)
    # per-head projection weights, stored as (n_head, n_embd, head_size) = W.T per head
    wq = jax.random.normal(kq, (n_head, n_embd, head_size), dtype=jnp.float32) * 0.1
    wk = jax.random.normal(kk, (n_head, n_embd, head_size), dtype=jnp.float32) * 0.1
    wv = jax.random.normal(kv, (n_head, n_embd, head_size), dtype=jnp.float32) * 0.1
    # output projection in PyTorch layout: weight (out, in) = (n_embd, n_embd), bias (n_embd,)
    proj_w = jax.random.normal(kw, (n_embd, n_embd), dtype=jnp.float32) * 0.1
    proj_b = jax.random.normal(kb, (n_embd,), dtype=jnp.float32) * 0.1

    # tq = tk = 8 so the 16-token sequence exercises multi-tile online softmax
    # and the causal tile-skip path (qi=0, ki=1 is fully masked -> skipped).
    out = multi_head_attention(x, wq, wk, wv, proj_w, proj_b, tq=8, tk=8)
    out = jax.block_until_ready(out)

    ref = reference(x, wq, wk, wv, proj_w, proj_b)
    assert out.shape == (B, T, n_embd)
    # bf16 matmul operands + approx reciprocal -> looser tolerance than pure f32
    assert jnp.allclose(out, ref, atol=2e-2, rtol=2e-2), "mismatch vs pure-JAX reference"

    print("KERNEL_OK")
</pallas_src>

<mosaic_0001>
module attributes {stable_mosaic.version = 11 : i64} {
  func.func @_flash_mha_kernel(%arg0: i32, %arg1: i32, %arg2: i32, %arg3: memref<1x8x32xbf16, #tpu.memory_space<vmem>>, %arg4: memref<1x8x32xbf16, #tpu.memory_space<vmem>>, %arg5: memref<32x32xbf16, #tpu.memory_space<vmem>>, %arg6: memref<32x32xbf16, #tpu.memory_space<vmem>>, %arg7: memref<32x32xbf16, #tpu.memory_space<vmem>>, %arg8: memref<32x32xbf16, #tpu.memory_space<vmem>>, %arg9: memref<1x32xf32, #tpu.memory_space<vmem>>, %arg10: memref<1x8x32xf32, #tpu.memory_space<vmem>>, %arg11: memref<4x8x1xf32, #tpu.memory_space<vmem>>, %arg12: memref<4x8x1xf32, #tpu.memory_space<vmem>>, %arg13: memref<4x8x8xf32, #tpu.memory_space<vmem>>) attributes {dimension_semantics = [#tpu.dimension_semantics<parallel>, #tpu.dimension_semantics<parallel>, #tpu.dimension_semantics<arbitrary>], iteration_bounds = array<i64: 2, 2, 2>, scalar_prefetch = 0 : i64, scratch_operands = 3 : i64, tpu.core_type = #tpu.core_type<tc>, window_params = [{transform_indices = @transform_0, window_bounds = array<i64: 1, 8, 32>}, {transform_indices = @transform_1, window_bounds = array<i64: 1, 8, 32>}, {pipeline_mode = #tpu.pipeline_mode<synchronous>, transform_indices = @transform_2, window_bounds = array<i64: 32, 32>}, {pipeline_mode = #tpu.pipeline_mode<synchronous>, transform_indices = @transform_3, window_bounds = array<i64: 32, 32>}, {pipeline_mode = #tpu.pipeline_mode<synchronous>, transform_indices = @transform_4, window_bounds = array<i64: 32, 32>}, {pipeline_mode = #tpu.pipeline_mode<synchronous>, transform_indices = @transform_5, window_bounds = array<i64: 32, 32>}, {pipeline_mode = #tpu.pipeline_mode<synchronous>, transform_indices = @transform_6, window_bounds = array<i64: 1, 32>}, {transform_indices = @transform_7, window_bounds = array<i64: 1, 8, 32>}]} {
    %c0_i32 = arith.constant 0 : i32
    %0 = arith.cmpi eq, %arg2, %c0_i32 : i32
    %1 = arith.extui %0 : i1 to i32
    %c0_i32_0 = arith.constant 0 : i32
    %2 = arith.cmpi ne, %1, %c0_i32_0 : i32
    scf.if %2 {
      %cst = arith.constant -1.000000e+30 : f32
      %12 = vector.broadcast %cst : f32 to vector<4x8x1xf32>
      %c0 = arith.constant 0 : index
      %c0_5 = arith.constant 0 : index
      %c0_6 = arith.constant 0 : index
      %13 = vector.load %arg11[%c0, %c0_5, %c0_6] : memref<4x8x1xf32, #tpu.memory_space<vmem>>, vector<4x8x1xf32>
      tpu.vector_store %arg11[%c0, %c0_5, %c0_6], %12 {strides = array<i32>} : memref<4x8x1xf32, #tpu.memory_space<vmem>>, vector<4x8x1xf32>,
      %cst_7 = arith.constant 0.000000e+00 : f32
      %14 = vector.broadcast %cst_7 : f32 to vector<4x8x1xf32>
      %c0_8 = arith.constant 0 : index
      %c0_9 = arith.constant 0 : index
      %c0_10 = arith.constant 0 : index
      %15 = vector.load %arg12[%c0_8, %c0_9, %c0_10] : memref<4x8x1xf32, #tpu.memory_space<vmem>>, vector<4x8x1xf32>
      tpu.vector_store %arg12[%c0_8, %c0_9, %c0_10], %14 {strides = array<i32>} : memref<4x8x1xf32, #tpu.memory_space<vmem>>, vector<4x8x1xf32>,
      %cst_11 = arith.constant 0.000000e+00 : f32
      %16 = vector.broadcast %cst_11 : f32 to vector<4x8x8xf32>
      %c0_12 = arith.constant 0 : index
      %c0_13 = arith.constant 0 : index
      %c0_14 = arith.constant 0 : index
      %17 = vector.load %arg13[%c0_12, %c0_13, %c0_14] : memref<4x8x8xf32, #tpu.memory_space<vmem>>, vector<4x8x8xf32>
      tpu.vector_store %arg13[%c0_12, %c0_13, %c0_14], %16 {strides = array<i32>} : memref<4x8x8xf32, #tpu.memory_space<vmem>>, vector<4x8x8xf32>,
    } else {
    }
    %c8_i32 = arith.constant 8 : i32
    %3 = arith.muli %arg2, %c8_i32 : i32
    %c1_i32 = arith.constant 1 : i32
    %4 = arith.addi %arg1, %c1_i32 : i32
    %c8_i32_1 = arith.constant 8 : i32
    %5 = arith.muli %4, %c8_i32_1 : i32
    %6 = arith.cmpi slt, %3, %5 : i32
    %7 = arith.extui %6 : i1 to i32
    %c0_i32_2 = arith.constant 0 : i32
    %8 = arith.cmpi ne, %7, %c0_i32_2 : i32
    scf.if %8 {
      %c0 = arith.constant 0 : index
      %c0_5 = arith.constant 0 : index
      %c0_6 = arith.constant 0 : index
      %12 = vector.load %arg3[%c0, %c0_5, %c0_6] : memref<1x8x32xbf16, #tpu.memory_space<vmem>>, vector<1x8x32xbf16>
      %13 = vector.shape_cast %12 : vector<1x8x32xbf16> to vector<8x32xbf16>
      %c0_7 = arith.constant 0 : index
      %c0_8 = arith.constant 0 : index
      %c0_9 = arith.constant 0 : index
      %14 = vector.load %arg4[%c0_7, %c0_8, %c0_9] : memref<1x8x32xbf16, #tpu.memory_space<vmem>>, vector<1x8x32xbf16>
      %15 = vector.shape_cast %14 : vector<1x8x32xbf16> to vector<8x32xbf16>
      %c0_10 = arith.constant 0 : index
      %c0_11 = arith.constant 0 : index
      %16 = vector.load %arg5[%c0_10, %c0_11] : memref<32x32xbf16, #tpu.memory_space<vmem>>, vector<32x32xbf16>
      %cst = arith.constant dense<0.000000e+00> : vector<8x32xf32>
      %17 = tpu.matmul %13, %16, %cst {dimension_numbers = #tpu.dot_dimension_numbers<[1], [0], [0], [1], [0, 0, 1, 1], [], []>} : vector<8x32xbf16>, vector<32x32xbf16>, vector<8x32xf32> -> vector<8x32xf32>
      %c0_12 = arith.constant 0 : index
      %c0_13 = arith.constant 0 : index
      %18 = vector.load %arg6[%c0_12, %c0_13] : memref<32x32xbf16, #tpu.memory_space<vmem>>, vector<32x32xbf16>
      %cst_14 = arith.constant dense<0.000000e+00> : vector<8x32xf32>
      %19 = tpu.matmul %15, %18, %cst_14 {dimension_numbers = #tpu.dot_dimension_numbers<[1], [0], [0], [1], [0, 0, 1, 1], [], []>} : vector<8x32xbf16>, vector<32x32xbf16>, vector<8x32xf32> -> vector<8x32xf32>
      %c0_15 = arith.constant 0 : index
      %c0_16 = arith.constant 0 : index
      %20 = vector.load %arg7[%c0_15, %c0_16] : memref<32x32xbf16, #tpu.memory_space<vmem>>, vector<32x32xbf16>
      %cst_17 = arith.constant dense<0.000000e+00> : vector<8x32xf32>
      %21 = tpu.matmul %15, %20, %cst_17 {dimension_numbers = #tpu.dot_dimension_numbers<[1], [0], [0], [1], [0, 0, 1, 1], [], []>} : vector<8x32xbf16>, vector<32x32xbf16>, vector<8x32xf32> -> vector<8x32xf32>
      %22 = arith.truncf %17 : vector<8x32xf32> to vector<8x32xbf16>
      %23 = vector.shape_cast %22 : vector<8x32xbf16> to vector<8x4x8xbf16>
      %24 = tpu.transpose %23, [1, 0, 2] : vector<8x4x8xbf16> -> vector<4x8x8xbf16>
      %25 = arith.truncf %19 : vector<8x32xf32> to vector<8x32xbf16>
      %26 = vector.shape_cast %25 : vector<8x32xbf16> to vector<8x4x8xbf16>
      %27 = tpu.transpose %26, [1, 0, 2] : vector<8x4x8xbf16> -> vector<4x8x8xbf16>
      %28 = arith.truncf %21 : vector<8x32xf32> to vector<8x32xbf16>
      %29 = vector.shape_cast %28 : vector<8x32xbf16> to vector<8x4x8xbf16>
      %30 = tpu.transpose %29, [1, 0, 2] : vector<8x4x8xbf16> -> vector<4x8x8xbf16>
      "tpu.trace_start"() <{level = 10 : i32, message = "hqd,hkd->hqk"}> : () -> ()
      %cst_18 = arith.constant dense<0.000000e+00> : vector<4x8x8xf32>
      %31 = tpu.matmul %24, %27, %cst_18 {dimension_numbers = #tpu.dot_dimension_numbers<[2], [2], [1], [1], [0, 0, 0, 1, 1, 1], [0], [0]>} : vector<4x8x8xbf16>, vector<4x8x8xbf16>, vector<4x8x8xf32> -> vector<4x8x8xf32>
      "tpu.trace_stop"() : () -> ()
      %c8_i32_19 = arith.constant 8 : i32
      %32 = arith.muli %arg1, %c8_i32_19 : i32
      %33 = tpu.iota {dimensions = array<i32: 0>} : vector<8x8xi32>
      %34 = vector.broadcast %32 : i32 to vector<8x8xi32>
      %35 = arith.addi %34, %33 : vector<8x8xi32>
      %c8_i32_20 = arith.constant 8 : i32
      %36 = arith.muli %arg2, %c8_i32_20 : i32
      %37 = tpu.iota {dimensions = array<i32: 1>} : vector<8x8xi32>
      %38 = vector.broadcast %36 : i32 to vector<8x8xi32>
      %39 = arith.addi %38, %37 : vector<8x8xi32>
      %40 = arith.cmpi sle, %39, %35 : vector<8x8xi32>
      %41 = vector.shape_cast %40 : vector<8x8xi1> to vector<1x8x8xi1>
      %cst_21 = arith.constant -1.000000e+30 : f32
      %42 = vector.shape_cast %41 : vector<1x8x8xi1> to vector<1x8x8xi1>
      %43 = vector.broadcast %42 : vector<1x8x8xi1> to vector<4x8x8xi1>
      %44 = vector.broadcast %cst_21 : f32 to vector<4x8x8xf32>
      %45 = arith.select %43, %31, %44 : vector<4x8x8xi1>, vector<4x8x8xf32>
      %c0_22 = arith.constant 0 : index
      %c0_23 = arith.constant 0 : index
      %c0_24 = arith.constant 0 : index
      %46 = vector.load %arg11[%c0_22, %c0_23, %c0_24] : memref<4x8x1xf32, #tpu.memory_space<vmem>>, vector<4x8x1xf32>
      %cst_25 = arith.constant dense<0xFF800000> : vector<4x8xf32>
      %47 = vector.multi_reduction <maximumf>, %45, %cst_25 [2] : vector<4x8x8xf32> to vector<4x8xf32>
      %48 = vector.shape_cast %47 : vector<4x8xf32> to vector<4x8x1xf32>
      %49 = arith.maximumf %46, %48 : vector<4x8x1xf32>
      %50 = arith.subf %46, %49 : vector<4x8x1xf32>
      %51 = math.exp %50 : vector<4x8x1xf32>
      %52 = vector.broadcast %49 : vector<4x8x1xf32> to vector<4x8x8xf32>
      %53 = arith.subf %45, %52 : vector<4x8x8xf32>
      %54 = math.exp %53 : vector<4x8x8xf32>
      %c0_26 = arith.constant 0 : index
      %c0_27 = arith.constant 0 : index
      %c0_28 = arith.constant 0 : index
      %55 = vector.load %arg12[%c0_26, %c0_27, %c0_28] : memref<4x8x1xf32, #tpu.memory_space<vmem>>, vector<4x8x1xf32>
      %56 = arith.mulf %51, %55 : vector<4x8x1xf32>
      %cst_29 = arith.constant dense<0.000000e+00> : vector<4x8xf32>
      %57 = vector.multi_reduction <add>, %54, %cst_29 [2] : vector<4x8x8xf32> to vector<4x8xf32>
      %58 = vector.shape_cast %57 : vector<4x8xf32> to vector<4x8x1xf32>
      %59 = arith.addf %56, %58 : vector<4x8x1xf32>
      %c0_30 = arith.constant 0 : index
      %c0_31 = arith.constant 0 : index
      %c0_32 = arith.constant 0 : index
      %60 = vector.load %arg12[%c0_30, %c0_31, %c0_32] : memref<4x8x1xf32, #tpu.memory_space<vmem>>, vector<4x8x1xf32>
      tpu.vector_store %arg12[%c0_30, %c0_31, %c0_32], %59 {strides = array<i32>} : memref<4x8x1xf32, #tpu.memory_space<vmem>>, vector<4x8x1xf32>,
      %61 = arith.truncf %54 : vector<4x8x8xf32> to vector<4x8x8xbf16>
      "tpu.trace_start"() <{level = 10 : i32, message = "hqk,hkd->hqd"}> : () -> ()
      %cst_33 = arith.constant dense<0.000000e+00> : vector<4x8x8xf32>
      %62 = tpu.matmul %61, %30, %cst_33 {dimension_numbers = #tpu.dot_dimension_numbers<[2], [1], [1], [2], [0, 0, 0, 1, 1, 2], [0], [0]>} : vector<4x8x8xbf16>, vector<4x8x8xbf16>, vector<4x8x8xf32> -> vector<4x8x8xf32>
      "tpu.trace_stop"() : () -> ()
      %c0_34 = arith.constant 0 : index
      %c0_35 = arith.constant 0 : index
      %c0_36 = arith.constant 0 : index
      %63 = vector.load %arg13[%c0_34, %c0_35, %c0_36] : memref<4x8x8xf32, #tpu.memory_space<vmem>>, vector<4x8x8xf32>
      %64 = vector.broadcast %51 : vector<4x8x1xf32> to vector<4x8x8xf32>
      %65 = arith.mulf %64, %63 : vector<4x8x8xf32>
      %66 = arith.addf %65, %62 : vector<4x8x8xf32>
      %c0_37 = arith.constant 0 : index
      %c0_38 = arith.constant 0 : index
      %c0_39 = arith.constant 0 : index
      %67 = vector.load %arg13[%c0_37, %c0_38, %c0_39] : memref<4x8x8xf32, #tpu.memory_space<vmem>>, vector<4x8x8xf32>
      tpu.vector_store %arg13[%c0_37, %c0_38, %c0_39], %66 {strides = array<i32>} : memref<4x8x8xf32, #tpu.memory_space<vmem>>, vector<4x8x8xf32>,
      %c0_40 = arith.constant 0 : index
      %c0_41 = arith.constant 0 : index
      %c0_42 = arith.constant 0 : index
      %68 = vector.load %arg11[%c0_40, %c0_41, %c0_42] : memref<4x8x1xf32, #tpu.memory_space<vmem>>, vector<4x8x1xf32>
      tpu.vector_store %arg11[%c0_40, %c0_41, %c0_42], %49 {strides = array<i32>} : memref<4x8x1xf32, #tpu.memory_space<vmem>>, vector<4x8x1xf32>,
    } else {
    }
    %c1_i32_3 = arith.constant 1 : i32
    %9 = arith.cmpi eq, %arg2, %c1_i32_3 : i32
    %10 = arith.extui %9 : i1 to i32
    %c0_i32_4 = arith.constant 0 : i32
    %11 = arith.cmpi ne, %10, %c0_i32_4 : i32
    scf.if %11 {
      %c0 = arith.constant 0 : index
      %c0_5 = arith.constant 0 : index
      %c0_6 = arith.constant 0 : index
      %12 = vector.load %arg12[%c0, %c0_5, %c0_6] : memref<4x8x1xf32, #tpu.memory_space<vmem>>, vector<4x8x1xf32>
      %13 = tpu.reciprocal %12 {approx = true} : vector<4x8x1xf32> -> vector<4x8x1xf32>
      %c0_7 = arith.constant 0 : index
      %c0_8 = arith.constant 0 : index
      %c0_9 = arith.constant 0 : index
      %14 = vector.load %arg13[%c0_7, %c0_8, %c0_9] : memref<4x8x8xf32, #tpu.memory_space<vmem>>, vector<4x8x8xf32>
      %15 = vector.broadcast %13 : vector<4x8x1xf32> to vector<4x8x8xf32>
      %16 = arith.mulf %14, %15 : vector<4x8x8xf32>
      %17 = tpu.transpose %16, [1, 0, 2] : vector<4x8x8xf32> -> vector<8x4x8xf32>
      %18 = vector.shape_cast %17 : vector<8x4x8xf32> to vector<8x32xf32>
      %19 = arith.truncf %18 : vector<8x32xf32> to vector<8x32xbf16>
      %c0_10 = arith.constant 0 : index
      %c0_11 = arith.constant 0 : index
      %20 = vector.load %arg8[%c0_10, %c0_11] : memref<32x32xbf16, #tpu.memory_space<vmem>>, vector<32x32xbf16>
      %cst = arith.constant dense<0.000000e+00> : vector<8x32xf32>
      %21 = tpu.matmul %19, %20, %cst {dimension_numbers = #tpu.dot_dimension_numbers<[1], [0], [0], [1], [0, 0, 1, 1], [], []>} : vector<8x32xbf16>, vector<32x32xbf16>, vector<8x32xf32> -> vector<8x32xf32>
      %c0_12 = arith.constant 0 : index
      %c0_13 = arith.constant 0 : index
      %22 = vector.load %arg9[%c0_12, %c0_13] : memref<1x32xf32, #tpu.memory_space<vmem>>, vector<1x32xf32>
      %23 = vector.broadcast %22 : vector<1x32xf32> to vector<8x32xf32>
      %24 = arith.addf %21, %23 : vector<8x32xf32>
      %c0_14 = arith.constant 0 : index
      %c0_15 = arith.constant 0 : index
      %c0_16 = arith.constant 0 : index
      %25 = vector.load %arg10[%c0_14, %c0_15, %c0_16] : memref<1x8x32xf32, #tpu.memory_space<vmem>>, vector<1x8x32xf32>
      %26 = vector.shape_cast %25 : vector<1x8x32xf32> to vector<8x32xf32>
      %27 = vector.shape_cast %24 : vector<8x32xf32> to vector<1x8x32xf32>
      tpu.vector_store %arg10[%c0_14, %c0_15, %c0_16], %27 {strides = array<i32>} : memref<1x8x32xf32, #tpu.memory_space<vmem>>, vector<1x8x32xf32>,
    } else {
    }
    return
  }
  func.func @transform_0(%arg0: i32, %arg1: i32, %arg2: i32) -> (i32, i32, i32) {
    %c0_i32 = arith.constant 0 : i32
    %c0_i32_0 = arith.constant 0 : i32
    return %arg0, %arg1, %c0_i32 : i32, i32, i32
  }
  func.func @transform_1(%arg0: i32, %arg1: i32, %arg2: i32) -> (i32, i32, i32) {
    %c0_i32 = arith.constant 0 : i32
    %c0_i32_0 = arith.constant 0 : i32
    return %arg0, %arg2, %c0_i32 : i32, i32, i32
  }
  func.func @transform_2(%arg0: i32, %arg1: i32, %arg2: i32) -> (i32, i32) {
    %c0_i32 = arith.constant 0 : i32
    %c0_i32_0 = arith.constant 0 : i32
    %c0_i32_1 = arith.constant 0 : i32
    return %c0_i32, %c0_i32_0 : i32, i32
  }
  func.func @transform_3(%arg0: i32, %arg1: i32, %arg2: i32) -> (i32, i32) {
    %c0_i32 = arith.constant 0 : i32
    %c0_i32_0 = arith.constant 0 : i32
    %c0_i32_1 = arith.constant 0 : i32
    return %c0_i32, %c0_i32_0 : i32, i32
  }
  func.func @transform_4(%arg0: i32, %arg1: i32, %arg2: i32) -> (i32, i32) {
    %c0_i32 = arith.constant 0 : i32
    %c0_i32_0 = arith.constant 0 : i32
    %c0_i32_1 = arith.constant 0 : i32
    return %c0_i32, %c0_i32_0 : i32, i32
  }
  func.func @transform_5(%arg0: i32, %arg1: i32, %arg2: i32) -> (i32, i32) {
    %c0_i32 = arith.constant 0 : i32
    %c0_i32_0 = arith.constant 0 : i32
    %c0_i32_1 = arith.constant 0 : i32
    return %c0_i32, %c0_i32_0 : i32, i32
  }
  func.func @transform_6(%arg0: i32, %arg1: i32, %arg2: i32) -> (i32, i32) {
    %c0_i32 = arith.constant 0 : i32
    %c0_i32_0 = arith.constant 0 : i32
    %c0_i32_1 = arith.constant 0 : i32
    return %c0_i32, %c0_i32_0 : i32, i32
  }
  func.func @transform_7(%arg0: i32, %arg1: i32, %arg2: i32) -> (i32, i32, i32) {
    %c0_i32 = arith.constant 0 : i32
    %c0_i32_0 = arith.constant 0 : i32
    return %arg0, %arg1, %c0_i32 : i32, i32, i32
  }
}

</mosaic_0001>

<llo_original>
// kernel: tpu_custom_call.1
$region0: #{tpu_custom_call.1}
  #allocation0 [shape = 'u32[]', space=smem, size = 0x4, offset = 0x4, fixed_abs, tag = 'smem constant byte address 0x4 - core index']
  #allocation1 [shape = 'u32[144,128]{1,0:T(1,128)}', space=vmem, size = 0x12000, scoped, tag = 'internal scratch']
  #allocation2 [shape = 'f32[4,8,1]{2,1,0:T(8,128)}', space=vmem, size = 0x4000, scoped, tag = 'scratch operand']
  #allocation3 [shape = 'f32[4,8,1]{2,1,0:T(8,128)}', space=vmem, size = 0x4000, scoped, tag = 'scratch operand']
  #allocation4 [shape = 'f32[4,8,8]{2,1,0:T(8,128)}', space=vmem, size = 0x4000, scoped, tag = 'scratch operand']
  %s0 = inlined_call_operand.hbm [shape: bf16[2,16,32], index: 0, kind: input, shape index: {}]
  %s1 = inlined_call_operand.hbm [shape: bf16[2,16,32], index: 1, kind: input, shape index: {}]
  %s2 = inlined_call_operand.hbm [shape: bf16[32,32], index: 2, kind: input, shape index: {}]
  %s3 = inlined_call_operand.hbm [shape: bf16[32,32], index: 3, kind: input, shape index: {}]
  %s4 = inlined_call_operand.hbm [shape: bf16[32,32], index: 4, kind: input, shape index: {}]
  %s5 = inlined_call_operand.vmem [shape: bf16[32,32], index: 5, kind: input, shape index: {}]
  %s6 = inlined_call_operand.vmem [shape: f32[1,32], index: 6, kind: input, shape index: {}]
  %s7 = inlined_call_operand.hbm [shape: f32[2,16,32], index: 7, kind: output, shape index: {}]
  %s8 = sld [smem:[#allocation0]]
  $region93: #{tpu_custom_call.1} parent=0
    _
  %s10 = ssub.s32 1, %s8
  %s11 = scalar_select 0, %s10, %s8
  $region1: #{tpu_custom_call.1} parent=0
    #allocation5 [shape = 'u8[4096]{0}', space=vmem, size = 0x1000, scoped, tag = 'input window, operand 0']
    #allocation6 [shape = 's32[2]{0}', space=sflag, size = 0x8, scoped, tag = 'scoped memory for tpu_custom_call.1']
    #allocation7 [shape = 's32[2]{0}', space=sflag, size = 0x8, scoped, tag = 'scoped memory for tpu_custom_call.1']
    #allocation8 [shape = 'u8[4096]{0}', space=vmem, size = 0x1000, scoped, tag = 'input window, operand 1']
    #allocation9 [shape = 's32[2]{0}', space=sflag, size = 0x8, scoped, tag = 'scoped memory for tpu_custom_call.1']
    #allocation10 [shape = 'u8[8192]{0}', space=vmem, size = 0x2000, scoped, tag = 'input window, operand 2, single buffered']
    #allocation11 [shape = 'u8[8192]{0}', space=vmem, size = 0x2000, scoped, tag = 'input window, operand 3, single buffered']
    #allocation12 [shape = 's32[1]{0}', space=sflag, size = 0x4, scoped, tag = 'scoped memory for tpu_custom_call.1']
    #allocation13 [shape = 'u8[8192]{0}', space=vmem, size = 0x2000, scoped, tag = 'input window, operand 4, single buffered']
    #allocation14 [shape = 'u8[8192]{0}', space=vmem, size = 0x2000, scoped, tag = 'output window, operand 0']
    %12 = vsyncpa [#allocation6], 0
    %s13 = scalar_lea.sflag [#allocation6], 1
    %14 = vsyncpa %s13, 0
    %15 = vsyncpa [#allocation9], 0
    %s16 = scalar_lea.sflag [#allocation9], 1
    %17 = vsyncpa %s16, 0
    %18 = vsyncpa [#allocation12], 0
    %19 = vsyncpa [#allocation7], 0
    %s20 = scalar_lea.sflag [#allocation7], 1
    %21 = vsyncpa %s20, 0
    loop: start=0, step=1, limit=10
    $region2: #{tpu_custom_call.1} parent=1 // loop_pre_header
      _
    $region3: #{tpu_custom_call.1} parent=1 // loop_header
      %s23 = sphi 0, %s27
      %p24 = scmp.ge.s32.totalorder %s23, 10
      %s30 = sphi 0, %s49
      %s31 = sphi 0, %s45
      %s32 = sphi 0, %s41
      %s33 = sphi 0, %s30
      %s34 = sphi 0, %s31
      %s35 = sphi 0, %s32
      %s36 = sphi 0, %s33
      %s37 = sphi 0, %s34
      %s38 = sphi 0, %s35
      %s54 = sphi 0, %s56
      %s57 = sphi 0, %s54
      %s58 = sphi 0, %s57
      %s74 = sphi 0, %s58
      %s82 = sphi 0, %s84
      %s85 = sphi 0, %s82
      %s86 = sphi 0, %s85
      %s102 = sphi 0, %s86
      %s106 = sphi 0, %s106
      %s108 = sphi 0, %s106
      %s109 = sphi 0, %s108
      %s123 = sphi 0, %s109
      %s127 = sphi 0, %s127
      %s129 = sphi 0, %s127
      %s130 = sphi 0, %s129
      %s144 = sphi 0, %s130
      %s148 = sphi 0, %s148
      %s150 = sphi 0, %s148
      %s151 = sphi 0, %s150
      %s165 = sphi 0, %s151
      %s169 = sphi 0, %s169
      %s171 = sphi 0, %s169
      %s172 = sphi 0, %s171
      %s186 = sphi 0, %s172
      %s190 = sphi 0, %s190
      %s192 = sphi 0, %s190
      %s193 = sphi 0, %s192
      %s207 = sphi 0, %s193
      %s215 = sphi 0, %s217
      %s218 = sphi 0, %s215
      %s219 = sphi 0, %s218
      %s235 = sphi 0, %s219
    $region4: #{tpu_custom_call.1} parent=1 // loop_header_branch
      %26 = sbr.rel (%p24) target = $region8
    $region5: #{tpu_custom_call.1} parent=1 // loop_body
      %s28 = ssub.s32 %s23, 1
      %s29 = ssub.s32 %s23, 2
      %s39 = sadd.s32 1, %s32
      %p40 = scmp.ge.s32.totalorder %s39, 2
      %s41 = scalar_select %p40, 0, %s39
      %s42 = sadd.s32 1, %s31
      %s43 = scalar_select %p40, %s42, %s31
      %p44 = scmp.ge.s32.totalorder %s43, 2
      %s45 = scalar_select %p44, 0, %s43
      %s46 = sadd.s32 1, %s30
      %s47 = scalar_select %p44, %s46, %s30
      %p48 = scmp.ge.s32.totalorder %s47, 2
      %s49 = scalar_select %p48, 0, %s47
      %s50 = ssub.s32 %s30, %s49
      %s51 = ssub.s32 %s31, %s45
      %s52 = sor.u32 %s50, %s51
      %p53 = scmp.eq.s32.totalorder %s52, 0
      %s55 = sadd.s32 %s54, 1
      %s56 = scalar_select %p53, %s54, %s55
      %p59 = pneg %p53
      %p60 = scmp.eq.s32.totalorder %s23, 7
      %p61 = por %p59, %p60
      %p62 = scmp.ne.s32.totalorder %s54, %s57
      %p63 = scmp.eq.s32.totalorder %s23, 0
      %p64 = por %p62, %p63
      %p65 = scmp.ne.s32.totalorder %s54, %s57
      %p66 = scmp.eq.s32.totalorder %s28, 7
      %p67 = por %p65, %p66
      %p68 = scmp.ne.s32.totalorder %s57, %s58
      %p69 = scmp.eq.s32.totalorder %s28, 0
      %p70 = por %p68, %p69
      %p71 = scmp.ne.s32.totalorder %s57, %s58
      %p72 = scmp.eq.s32.totalorder %s29, 7
      %p73 = por %p71, %p72
      %p75 = scmp.ne.s32.totalorder %s58, %s74
      %p76 = scmp.eq.s32.totalorder %s29, 0
      %p77 = por %p75, %p76
      %s78 = ssub.s32 %s30, %s49
      %s79 = ssub.s32 %s32, %s41
      %s80 = sor.u32 %s78, %s79
      %p81 = scmp.eq.s32.totalorder %s80, 0
      %s83 = sadd.s32 %s82, 1
      %s84 = scalar_select %p81, %s82, %s83
      %p87 = pneg %p81
      %p88 = scmp.eq.s32.totalorder %s23, 7
      %p89 = por %p87, %p88
      %p90 = scmp.ne.s32.totalorder %s82, %s85
      %p91 = scmp.eq.s32.totalorder %s23, 0
      %p92 = por %p90, %p91
      %p93 = scmp.ne.s32.totalorder %s82, %s85
      %p94 = scmp.eq.s32.totalorder %s28, 7
      %p95 = por %p93, %p94
      %p96 = scmp.ne.s32.totalorder %s85, %s86
      %p97 = scmp.eq.s32.totalorder %s28, 0
      %p98 = por %p96, %p97
      %p99 = scmp.ne.s32.totalorder %s85, %s86
      %p100 = scmp.eq.s32.totalorder %s29, 7
      %p101 = por %p99, %p100
      %p103 = scmp.ne.s32.totalorder %s86, %s102
      %p104 = scmp.eq.s32.totalorder %s29, 0
      %p105 = por %p103, %p104
      %s107 = sadd.s32 %s106, 1
      %p110 = scmp.eq.s32.totalorder %s23, 7
      %p111 = scmp.ne.s32.totalorder %s106, %s108
      %p112 = scmp.eq.s32.totalorder %s23, 0
      %p113 = por %p111, %p112
      %p114 = scmp.ne.s32.totalorder %s106, %s108
      %p115 = scmp.eq.s32.totalorder %s28, 7
      %p116 = por %p114, %p115
      %p117 = scmp.ne.s32.totalorder %s108, %s109
      %p118 = scmp.eq.s32.totalorder %s28, 0
      %p119 = por %p117, %p118
      %p120 = scmp.ne.s32.totalorder %s108, %s109
      %p121 = scmp.eq.s32.totalorder %s29, 7
      %p122 = por %p120, %p121
      %p124 = scmp.ne.s32.totalorder %s109, %s123
      %p125 = scmp.eq.s32.totalorder %s29, 0
      %p126 = por %p124, %p125
      %s128 = sadd.s32 %s127, 1
      %p131 = scmp.eq.s32.totalorder %s23, 7
      %p132 = scmp.ne.s32.totalorder %s127, %s129
      %p133 = scmp.eq.s32.totalorder %s23, 0
      %p134 = por %p132, %p133
      %p135 = scmp.ne.s32.totalorder %s127, %s129
      %p136 = scmp.eq.s32.totalorder %s28, 7
      %p137 = por %p135, %p136
      %p138 = scmp.ne.s32.totalorder %s129, %s130
      %p139 = scmp.eq.s32.totalorder %s28, 0
      %p140 = por %p138, %p139
      %p141 = scmp.ne.s32.totalorder %s129, %s130
      %p142 = scmp.eq.s32.totalorder %s29, 7
      %p143 = por %p141, %p142
      %p145 = scmp.ne.s32.totalorder %s130, %s144
      %p146 = scmp.eq.s32.totalorder %s29, 0
      %p147 = por %p145, %p146
      %s149 = sadd.s32 %s148, 1
      %p152 = scmp.eq.s32.totalorder %s23, 7
      %p153 = scmp.ne.s32.totalorder %s148, %s150
      %p154 = scmp.eq.s32.totalorder %s23, 0
      %p155 = por %p153, %p154
      %p156 = scmp.ne.s32.totalorder %s148, %s150
      %p157 = scmp.eq.s32.totalorder %s28, 7
      %p158 = por %p156, %p157
      %p159 = scmp.ne.s32.totalorder %s150, %s151
      %p160 = scmp.eq.s32.totalorder %s28, 0
      %p161 = por %p159, %p160
      %p162 = scmp.ne.s32.totalorder %s150, %s151
      %p163 = scmp.eq.s32.totalorder %s29, 7
      %p164 = por %p162, %p163
      %p166 = scmp.ne.s32.totalorder %s151, %s165
      %p167 = scmp.eq.s32.totalorder %s29, 0
      %p168 = por %p166, %p167
      %s170 = sadd.s32 %s169, 1
      %p173 = scmp.eq.s32.totalorder %s23, 7
      %p174 = scmp.ne.s32.totalorder %s169, %s171
      %p175 = scmp.eq.s32.totalorder %s23, 0
      %p176 = por %p174, %p175
      %p177 = scmp.ne.s32.totalorder %s169, %s171
      %p178 = scmp.eq.s32.totalorder %s28, 7
      %p179 = por %p177, %p178
      %p180 = scmp.ne.s32.totalorder %s171, %s172
      %p181 = scmp.eq.s32.totalorder %s28, 0
      %p182 = por %p180, %p181
      %p183 = scmp.ne.s32.totalorder %s171, %s172
      %p184 = scmp.eq.s32.totalorder %s29, 7
      %p185 = por %p183, %p184
      %p187 = scmp.ne.s32.totalorder %s172, %s186
      %p188 = scmp.eq.s32.totalorder %s29, 0
      %p189 = por %p187, %p188
      %s191 = sadd.s32 %s190, 1
      %p194 = scmp.eq.s32.totalorder %s23, 7
      %p195 = scmp.ne.s32.totalorder %s190, %s192
      %p196 = scmp.eq.s32.totalorder %s23, 0
      %p197 = por %p195, %p196
      %p198 = scmp.ne.s32.totalorder %s190, %s192
      %p199 = scmp.eq.s32.totalorder %s28, 7
      %p200 = por %p198, %p199
      %p201 = scmp.ne.s32.totalorder %s192, %s193
      %p202 = scmp.eq.s32.totalorder %s28, 0
      %p203 = por %p201, %p202
      %p204 = scmp.ne.s32.totalorder %s192, %s193
      %p205 = scmp.eq.s32.totalorder %s29, 7
      %p206 = por %p204, %p205
      %p208 = scmp.ne.s32.totalorder %s193, %s207
      %p209 = scmp.eq.s32.totalorder %s29, 0
      %p210 = por %p208, %p209
      %s211 = ssub.s32 %s30, %s49
      %s212 = ssub.s32 %s31, %s45
      %s213 = sor.u32 %s211, %s212
      %p214 = scmp.eq.s32.totalorder %s213, 0
      %s216 = sadd.s32 %s215, 1
      %s217 = scalar_select %p214, %s215, %s216
      %p220 = pneg %p214
      %p221 = scmp.eq.s32.totalorder %s23, 7
      %p222 = por %p220, %p221
      %p223 = scmp.ne.s32.totalorder %s215, %s218
      %p224 = scmp.eq.s32.totalorder %s23, 0
      %p225 = por %p223, %p224
      %p226 = scmp.ne.s32.totalorder %s215, %s218
      %p227 = scmp.eq.s32.totalorder %s28, 7
      %p228 = por %p226, %p227
      %p229 = scmp.ne.s32.totalorder %s218, %s219
      %p230 = scmp.eq.s32.totalorder %s28, 0
      %p231 = por %p229, %p230
      %p232 = scmp.ne.s32.totalorder %s218, %s219
      %p233 = scmp.eq.s32.totalorder %s29, 7
      %p234 = por %p232, %p233
      %p236 = scmp.ne.s32.totalorder %s219, %s235
      %p237 = scmp.eq.s32.totalorder %s29, 0
      %p238 = por %p236, %p237
      %p239 = scmp.le.s32.totalorder 1, %s23
      %p240 = scmp.lt.s32.totalorder %s23, 9
      %p241 = pnand %p239, %p240
      %p242 = pneg %p241
      // Predicated region
      $region9: #{tpu_custom_call.1} parent=5 // pred_check
        _
      $region10: #{tpu_custom_call.1} parent=5 // pred_check_branch
        %244 = sbr.rel (%p241) target = $region12
      $region11: #{tpu_custom_call.1} parent=5 // pred_region
        %s245 = ssub.s32 %s23, 1
        // Predicated region
        $region13: #{tpu_custom_call.1} parent=11 // pred_check
          %p246 = pneg %p119
        $region14: #{tpu_custom_call.1} parent=11 // pred_check_branch
          %248 = sbr.rel (%p246) target = $region16
        $region15: #{tpu_custom_call.1} parent=11 // pred_region
          %s250 = ssub.s32 256, 256
          %251 = vsyncadd [#allocation9], %s250
          %s252 = sshll.u32 [#allocation10], 4
          %s253 = int_to_ptr.vmem [resolvable:$true] %s252
          %258 = dma.hbm_to_vmem [thread:$0]  %s2, 256, %s253, [#allocation9], 64, 64, 4
        $region16: #{tpu_custom_call.1} parent=11 // pred_fallthru
          _
        // Predicated region
        $region17: #{tpu_custom_call.1} parent=11 // pred_check
          %p259 = pneg %p140
        $region18: #{tpu_custom_call.1} parent=11 // pred_check_branch
          %261 = sbr.rel (%p259) target = $region20
        $region19: #{tpu_custom_call.1} parent=11 // pred_region
          %s263 = ssub.s32 256, 256
          %264 = vsyncadd [#allocation12], %s263
          %s265 = sshll.u32 [#allocation11], 4
          %s266 = int_to_ptr.vmem [resolvable:$true] %s265
          %271 = dma.hbm_to_vmem [thread:$0]  %s3, 256, %s266, [#allocation12], 64, 64, 4
        $region20: #{tpu_custom_call.1} parent=11 // pred_fallthru
          _
        // Predicated region
        $region21: #{tpu_custom_call.1} parent=11 // pred_check
          %p272 = pneg %p161
        $region22: #{tpu_custom_call.1} parent=11 // pred_check_branch
          %274 = sbr.rel (%p272) target = $region24
        $region23: #{tpu_custom_call.1} parent=11 // pred_region
          %s276 = ssub.s32 256, 256
          %277 = vsyncadd [#allocation12], %s276
          %s278 = sshll.u32 [#allocation13], 4
          %s279 = int_to_ptr.vmem [resolvable:$true] %s278
          %284 = dma.hbm_to_vmem [thread:$0]  %s4, 256, %s279, [#allocation12], 64, 64, 4
        $region24: #{tpu_custom_call.1} parent=11 // pred_fallthru
          _
        // Predicated region
        $region25: #{tpu_custom_call.1} parent=11 // pred_check
          %p285 = pneg %p182
        $region26: #{tpu_custom_call.1} parent=11 // pred_check_branch
          %287 = sbr.rel (%p285) target = $region28
        $region27: #{tpu_custom_call.1} parent=11 // pred_region
          _
        $region28: #{tpu_custom_call.1} parent=11 // pred_fallthru
          _
        // Predicated region
        $region29: #{tpu_custom_call.1} parent=11 // pred_check
          %p288 = pneg %p203
        $region30: #{tpu_custom_call.1} parent=11 // pred_check_branch
          %290 = sbr.rel (%p288) target = $region32
        $region31: #{tpu_custom_call.1} parent=11 // pred_region
          _
        $region32: #{tpu_custom_call.1} parent=11 // pred_fallthru
          _
      $region12: #{tpu_custom_call.1} parent=5 // pred_fallthru
        _
      %p291 = scmp.lt.s32.totalorder %s23, 8
      // Predicated region
      $region33: #{tpu_custom_call.1} parent=5 // pred_check
        %p292 = pneg %p291
      $region34: #{tpu_custom_call.1} parent=5 // pred_check_branch
        %294 = sbr.rel (%p292) target = $region36
      $region35: #{tpu_custom_call.1} parent=5 // pred_region
        // Predicated region
        $region37: #{tpu_custom_call.1} parent=35 // pred_check
          %p295 = pneg %p64
        $region38: #{tpu_custom_call.1} parent=35 // pred_check_branch
          %297 = sbr.rel (%p295) target = $region40
        $region39: #{tpu_custom_call.1} parent=35 // pred_region
          %s298 = sand.u32 %s54, 1
          %s299 = scalar_lea.sflag [#allocation6], %s298
          %s300 = sand.u32 %s54, 1
          %s301 = smul.addr %s300, 4
          %s302 = scalar_lea.vmem [#allocation5], %s301
          %s304 = ssub.s32 64, 64
          %305 = vsyncadd %s299, %s304
          %s306 = smul.addr %s30, 2
          %s307 = sadd.s32 %s31, %s306
          %s308 = smul.addr %s307, 64
          %s309 = scalar_lea.hbm %s0, %s308
          %s311 = sshll.u32 %s302, 4
          %s312 = int_to_ptr.vmem [resolvable:$true] %s311
          %314 = dma.hbm_to_vmem [thread:$0]  %s309, 64, %s312, %s299
        $region40: #{tpu_custom_call.1} parent=35 // pred_fallthru
          _
        // Predicated region
        $region41: #{tpu_custom_call.1} parent=35 // pred_check
          %p315 = pneg %p92
        $region42: #{tpu_custom_call.1} parent=35 // pred_check_branch
          %317 = sbr.rel (%p315) target = $region44
        $region43: #{tpu_custom_call.1} parent=35 // pred_region
          %s318 = sand.u32 %s23, 1
          %s319 = scalar_lea.sflag [#allocation9], %s318
          %s320 = sand.u32 %s82, 1
          %s321 = smul.addr %s320, 4
          %s322 = scalar_lea.vmem [#allocation8], %s321
          %s324 = ssub.s32 64, 64
          %325 = vsyncadd %s319, %s324
          %s326 = smul.addr %s30, 2
          %s327 = sadd.s32 %s32, %s326
          %s328 = smul.addr %s327, 64
          %s329 = scalar_lea.hbm %s1, %s328
          %s331 = sshll.u32 %s322, 4
          %s332 = int_to_ptr.vmem [resolvable:$true] %s331
          %334 = dma.hbm_to_vmem [thread:$0]  %s329, 64, %s332, %s319
        $region44: #{tpu_custom_call.1} parent=35 // pred_fallthru
          _
      $region36: #{tpu_custom_call.1} parent=5 // pred_fallthru
        _
      %p335 = scmp.le.s32.totalorder 1, %s23
      %p336 = scmp.lt.s32.totalorder %s23, 9
      %p337 = pnand %p335, %p336
      %p338 = pneg %p337
      // Predicated region
      $region45: #{tpu_custom_call.1} parent=5 // pred_check
        _
      $region46: #{tpu_custom_call.1} parent=5 // pred_check_branch
        %340 = sbr.rel (%p337) target = $region48
      $region47: #{tpu_custom_call.1} parent=5 // pred_region
        %s341 = ssub.s32 %s23, 1
        %s342 = sand.u32 %s57, 1
        %s343 = scalar_lea.sflag [#allocation6], %s342
        %s344 = sand.u32 %s57, 1
        %s345 = smul.addr %s344, 4
        %s346 = scalar_lea.vmem [#allocation5], %s345
        // Predicated region
        $region49: #{tpu_custom_call.1} parent=47 // pred_check
          %p347 = pneg %p70
        $region50: #{tpu_custom_call.1} parent=47 // pred_check_branch
          %349 = sbr.rel (%p347) target = $region52
        $region51: #{tpu_custom_call.1} parent=47 // pred_region
          %350 = dma.done %s343, 64
        $region52: #{tpu_custom_call.1} parent=47 // pred_fallthru
          _
        %s351 = sand.u32 %s28, 1
        %s352 = scalar_lea.sflag [#allocation9], %s351
        %s353 = sand.u32 %s85, 1
        %s354 = smul.addr %s353, 4
        %s355 = scalar_lea.vmem [#allocation8], %s354
        // Predicated region
        $region53: #{tpu_custom_call.1} parent=47 // pred_check
          %p356 = pneg %p98
        $region54: #{tpu_custom_call.1} parent=47 // pred_check_branch
          %358 = sbr.rel (%p356) target = $region56
        $region55: #{tpu_custom_call.1} parent=47 // pred_region
          %359 = dma.done %s352, 64
        $region56: #{tpu_custom_call.1} parent=47 // pred_fallthru
          _
        // Predicated region
        $region57: #{tpu_custom_call.1} parent=47 // pred_check
          %p360 = pneg %p119
        $region58: #{tpu_custom_call.1} parent=47 // pred_check_branch
          %362 = sbr.rel (%p360) target = $region60
        $region59: #{tpu_custom_call.1} parent=47 // pred_region
          %363 = dma.done [#allocation9], 256
        $region60: #{tpu_custom_call.1} parent=47 // pred_fallthru
          _
        // Predicated region
        $region61: #{tpu_custom_call.1} parent=47 // pred_check
          %p364 = pneg %p140
        $region62: #{tpu_custom_call.1} parent=47 // pred_check_branch
          %366 = sbr.rel (%p364) target = $region64
        $region63: #{tpu_custom_call.1} parent=47 // pred_region
          %367 = dma.done [#allocation12], 256
        $region64: #{tpu_custom_call.1} parent=47 // pred_fallthru
          _
        // Predicated region
        $region65: #{tpu_custom_call.1} parent=47 // pred_check
          %p368 = pneg %p161
        $region66: #{tpu_custom_call.1} parent=47 // pred_check_branch
          %370 = sbr.rel (%p368) target = $region68
        $region67: #{tpu_custom_call.1} parent=47 // pred_region
          %371 = dma.done [#allocation12], 256
        $region68: #{tpu_custom_call.1} parent=47 // pred_fallthru
          _
        %s372 = sand.u32 %s57, 1
        %s373 = scalar_lea.sflag [#allocation6], %s372
        %s374 = sand.u32 %s57, 1
        %s375 = smul.addr %s374, 4
        %s376 = scalar_lea.vmem [#allocation5], %s375
        %p377 = pneg %p70
        %p378 = pneg %p67
        %s379 = sand.u32 %s28, 1
        %s380 = scalar_lea.sflag [#allocation9], %s379
        %s381 = sand.u32 %s85, 1
        %s382 = smul.addr %s381, 4
        %s383 = scalar_lea.vmem [#allocation8], %s382
        %p384 = pneg %p98
        %p385 = pneg %p95
        %p386 = pneg %p119
        %p387 = pneg %p116
        %p388 = pneg %p140
        %p389 = pneg %p137
        %p390 = pneg %p161
        %p391 = pneg %p158
        %p392 = pneg %p182
        %p393 = pneg %p179
        %p394 = pneg %p203
        %p395 = pneg %p200
        %p396 = pneg %p231
        %p397 = pneg %p228
        %s398 = sand.u32 %s218, 1
        %s399 = scalar_lea.sflag [#allocation7], %s398
        %s400 = sand.u32 %s218, 1
        %s401 = smul.addr %s400, 8
        %s402 = scalar_lea.vmem [#allocation14], %s401
        %p404 = scmp.eq.s32.totalorder %s35, 0
        // Predicated region
        $region69: #{tpu_custom_call.1} parent=47 // pred_check
          %p405 = pneg %p404
        $region70: #{tpu_custom_call.1} parent=47 // pred_check_branch
          %407 = sbr.rel (%p405) target = $region72
        $region71: #{tpu_custom_call.1} parent=47 // pred_region
          %vm408 = vcmask 7168
          %409 = vst.msk [vmem:[#allocation2] sm:$0xff] %vm408, -1e+30
          %410 = vst.msk [vmem:[#allocation2 + $0x8] sm:$0xff] %vm408, -1e+30
          %411 = vst.msk [vmem:[#allocation2 + $0x10] sm:$0xff] %vm408, -1e+30
          %412 = vst.msk [vmem:[#allocation2 + $0x18] sm:$0xff] %vm408, -1e+30
          %413 = vst.msk [vmem:[#allocation3] sm:$0xff] %vm408, 0.0
          %414 = vst.msk [vmem:[#allocation3 + $0x8] sm:$0xff] %vm408, 0.0
          %415 = vst.msk [vmem:[#allocation3 + $0x10] sm:$0xff] %vm408, 0.0
          %416 = vst.msk [vmem:[#allocation3 + $0x18] sm:$0xff] %vm408, 0.0
          %vm417 = vcmask 64512
          %418 = vst.msk [vmem:[#allocation4] sm:$0xff] %vm417, 0.0
          %419 = vst.msk [vmem:[#allocation4 + $0x8] sm:$0xff] %vm417, 0.0
          %420 = vst.msk [vmem:[#allocation4 + $0x10] sm:$0xff] %vm417, 0.0
          %421 = vst.msk [vmem:[#allocation4 + $0x18] sm:$0xff] %vm417, 0.0
        $region72: #{tpu_custom_call.1} parent=47 // pred_fallthru
          _
        %s422 = smul.u32 %s35, 8
        %s423 = sadd.s32 %s34, 1
        %s424 = smul.u32 %s423, 8
        %p425 = scmp.lt.s32.totalorder %s422, %s424
        // Predicated region
        $region73: #{tpu_custom_call.1} parent=47 // pred_check
          %p426 = pneg %p425
        $region74: #{tpu_custom_call.1} parent=47 // pred_check_branch
          %428 = sbr.rel (%p426) target = $region76
        $region75: #{tpu_custom_call.1} parent=47 // pred_region
          %v429 = vld [vmem:[%s346] sm:$0xf]
          %v430 = vld [vmem:[%s355] sm:$0xf]
          %v431 = vld [vmem:[#allocation10] sm:$0xf]
          %v432 = vld [vmem:[#allocation10 + $0x4] sm:$0xf]
          %v433 = vld [vmem:[#allocation10 + $0x8] sm:$0xf]
          %v434 = vld [vmem:[#allocation10 + $0xc] sm:$0xf]
          %v439 = vunpack.c.l.b16 %v431
          %v440 = vunpack.c.l.b16 %v432
          %v441 = vunpack.c.l.b16 %v433
          %v442 = vunpack.c.l.b16 %v434
          %v443 = vpack.c.b16 %v440, %v439
          %v444 = vpack.c.b16 %v442, %v441
          %vm447 = vcmask 261120
          %v449 = vsel %vm447, %v429, 0
          %451 = vmatprep.subr.bf16.mxu0 0
          %452 = vmatpush1.bf16.msra.mxu0 %v443
          %453 = vmatprep.subr.bf16.mxu0 0
          %454 = vmatpush1.bf16.msra.mxu0 %v444
          %455 = vmatprep.subr.bf16.mxu0 0
          %456 = vmatpush1.bf16.msra.mxu0 0
          %457 = vmatprep.subr.bf16.mxu0 0
          %458 = vmatpush1.bf16.msra.mxu0 0
          %459 = vmatprep.subr.bf16.mxu0 0
          %460 = vmatpush1.bf16.msra.mxu0 0
          %461 = vmatprep.subr.bf16.mxu0 0
          %462 = vmatpush1.bf16.msra.mxu0 0
          %463 = vmatprep.subr.bf16.mxu0 0
          %464 = vmatpush1.bf16.msra.mxu0 0
          %465 = vmatprep.subr.bf16.mxu0 0
          %466 = vmatpush1.bf16.msra.mxu0 0
          %467 = vmatprep.subr.bf16.mxu0 0
          %468 = vmatpush1.bf16.msra.mxu0 0
          %469 = vmatprep.subr.bf16.mxu0 0
          %470 = vmatpush1.bf16.msra.mxu0 0
          %471 = vmatprep.subr.bf16.mxu0 0
          %472 = vmatpush1.bf16.msra.mxu0 0
          %473 = vmatprep.subr.bf16.mxu0 0
          %474 = vmatpush1.bf16.msra.mxu0 0
          %475 = vmatprep.subr.bf16.mxu0 0
          %476 = vmatpush1.bf16.msra.mxu0 0
          %477 = vmatprep.subr.bf16.mxu0 0
          %478 = vmatpush1.bf16.msra.mxu0 0
          %479 = vmatprep.subr.bf16.mxu0 0
          %480 = vmatpush1.bf16.msra.mxu0 0
          %481 = vmatprep.subr.bf16.mxu0 0
          %482 = vmatpush1.bf16.msra.mxu0 0
          %483 = vmatprep.mubr.bf16.mxu0 0
          %484 = vmatmul.mubr.bf16.gmra.mrb[0].mxu0 %v449
          %v485 = vpop.f32.mrb[0].mxu0
          %v486 = vadd.f32 0.0, %v485
          %v487 = vpop.f32.mrb[0].mxu0
          %v488 = vpop.f32.mrb[0].mxu0
          %v489 = vpop.f32.mrb[0].mxu0
          %490 = vdwg.mxu0
          %v491 = vld [vmem:[#allocation11] sm:$0xf]
          %v492 = vld [vmem:[#allocation11 + $0x4] sm:$0xf]
          %v493 = vld [vmem:[#allocation11 + $0x8] sm:$0xf]
          %v494 = vld [vmem:[#allocation11 + $0xc] sm:$0xf]
          %v499 = vunpack.c.l.b16 %v491
          %v500 = vunpack.c.l.b16 %v492
          %v501 = vunpack.c.l.b16 %v493
          %v502 = vunpack.c.l.b16 %v494
          %v503 = vpack.c.b16 %v500, %v499
          %v504 = vpack.c.b16 %v502, %v501
          %v508 = vsel %vm447, %v430, 0
          %510 = vmatprep.subr.bf16.mxu0 0
          %511 = vmatpush1.bf16.msra.mxu0 %v503
          %512 = vmatprep.subr.bf16.mxu0 0
          %513 = vmatpush1.bf16.msra.mxu0 %v504
          %514 = vmatprep.subr.bf16.mxu0 0
          %515 = vmatpush1.bf16.msra.mxu0 0
          %516 = vmatprep.subr.bf16.mxu0 0
          %517 = vmatpush1.bf16.msra.mxu0 0
          %518 = vmatprep.subr.bf16.mxu0 0
          %519 = vmatpush1.bf16.msra.mxu0 0
          %520 = vmatprep.subr.bf16.mxu0 0
          %521 = vmatpush1.bf16.msra.mxu0 0
          %522 = vmatprep.subr.bf16.mxu0 0
          %523 = vmatpush1.bf16.msra.mxu0 0
          %524 = vmatprep.subr.bf16.mxu0 0
          %525 = vmatpush1.bf16.msra.mxu0 0
          %526 = vmatprep.subr.bf16.mxu0 0
          %527 = vmatpush1.bf16.msra.mxu0 0
          %528 = vmatprep.subr.bf16.mxu0 0
          %529 = vmatpush1.bf16.msra.mxu0 0
          %530 = vmatprep.subr.bf16.mxu0 0
          %531 = vmatpush1.bf16.msra.mxu0 0
          %532 = vmatprep.subr.bf16.mxu0 0
          %533 = vmatpush1.bf16.msra.mxu0 0
          %534 = vmatprep.subr.bf16.mxu0 0
          %535 = vmatpush1.bf16.msra.mxu0 0
          %536 = vmatprep.subr.bf16.mxu0 0
          %537 = vmatpush1.bf16.msra.mxu0 0
          %538 = vmatprep.subr.bf16.mxu0 0
          %539 = vmatpush1.bf16.msra.mxu0 0
          %540 = vmatprep.subr.bf16.mxu0 0
          %541 = vmatpush1.bf16.msra.mxu0 0
          %542 = vmatprep.mubr.bf16.mxu0 0
          %543 = vmatmul.mubr.bf16.gmra.mrb[0].mxu0 %v508
          %v544 = vpop.f32.mrb[0].mxu0
          %v545 = vadd.f32 0.0, %v544
          %v546 = vpop.f32.mrb[0].mxu0
          %v547 = vpop.f32.mrb[0].mxu0
          %v548 = vpop.f32.mrb[0].mxu0
          %549 = vdwg.mxu0
          %v550 = vld [vmem:[#allocation13] sm:$0xf]
          %v551 = vld [vmem:[#allocation13 + $0x4] sm:$0xf]
          %v552 = vld [vmem:[#allocation13 + $0x8] sm:$0xf]
          %v553 = vld [vmem:[#allocation13 + $0xc] sm:$0xf]
          %v558 = vunpack.c.l.b16 %v550
          %v559 = vunpack.c.l.b16 %v551
          %v560 = vunpack.c.l.b16 %v552
          %v561 = vunpack.c.l.b16 %v553
          %v562 = vpack.c.b16 %v559, %v558
          %v563 = vpack.c.b16 %v561, %v560
          %566 = vmatprep.subr.bf16.mxu0 0
          %567 = vmatpush1.bf16.msra.mxu0 %v562
          %568 = vmatprep.subr.bf16.mxu0 0
          %569 = vmatpush1.bf16.msra.mxu0 %v563
          %570 = vmatprep.subr.bf16.mxu0 0
          %571 = vmatpush1.bf16.msra.mxu0 0
          %572 = vmatprep.subr.bf16.mxu0 0
          %573 = vmatpush1.bf16.msra.mxu0 0
          %574 = vmatprep.subr.bf16.mxu0 0
          %575 = vmatpush1.bf16.msra.mxu0 0
          %576 = vmatprep.subr.bf16.mxu0 0
          %577 = vmatpush1.bf16.msra.mxu0 0
          %578 = vmatprep.subr.bf16.mxu0 0
          %579 = vmatpush1.bf16.msra.mxu0 0
          %580 = vmatprep.subr.bf16.mxu0 0
          %581 = vmatpush1.bf16.msra.mxu0 0
          %582 = vmatprep.subr.bf16.mxu0 0
          %583 = vmatpush1.bf16.msra.mxu0 0
          %584 = vmatprep.subr.bf16.mxu0 0
          %585 = vmatpush1.bf16.msra.mxu0 0
          %586 = vmatprep.subr.bf16.mxu0 0
          %587 = vmatpush1.bf16.msra.mxu0 0
          %588 = vmatprep.subr.bf16.mxu0 0
          %589 = vmatpush1.bf16.msra.mxu0 0
          %590 = vmatprep.subr.bf16.mxu0 0
          %591 = vmatpush1.bf16.msra.mxu0 0
          %592 = vmatprep.subr.bf16.mxu0 0
          %593 = vmatpush1.bf16.msra.mxu0 0
          %594 = vmatprep.subr.bf16.mxu0 0
          %595 = vmatpush1.bf16.msra.mxu0 0
          %596 = vmatprep.subr.bf16.mxu0 0
          %597 = vmatpush1.bf16.msra.mxu0 0
          %598 = vmatprep.mubr.bf16.mxu0 0
          %599 = vmatmul.mubr.bf16.gmra.mrb[0].mxu0 %v508
          %v600 = vpop.f32.mrb[0].mxu0
          %v601 = vadd.f32 0.0, %v600
          %v602 = vpop.f32.mrb[0].mxu0
          %v603 = vpop.f32.mrb[0].mxu0
          %v604 = vpop.f32.mrb[0].mxu0
          %605 = vdwg.mxu0
          %v606 = vpack.c.bf16 %v486, %v486
          %608 = vrot.lane.b32.xlu0 %v606, 120
          %v609 = vpop.permute.xlu0 %608
          %610 = vrot.lane.b32.xlu0 %v606, 112
          %v611 = vpop.permute.xlu0 %610
          %612 = vrot.lane.b32.xlu0 %v606, 104
          %v613 = vpop.permute.xlu0 %612
          %v615 = vunpack.c.l.s4 1983009808
          %v616 = vunpack.c.0.s8 %v615
          %v617 = vlaneseq
          %v618 = vshrl.u32 %v617, 7
          %v619 = vsub.s32 %v616, %v618
          %v620 = vrot.slane %v606, %v619
          %v623 = vunpack.c.l.s4 1983009808
          %v624 = vunpack.c.0.s8 %v623
          %v625 = vlaneseq
          %v626 = vshrl.u32 %v625, 7
          %v627 = vsub.s32 %v624, %v626
          %v628 = vrot.slane %v611, %v627
          %v629 = vcombine.low %v620, %v628
          %v630 = vcombine.high %v620, %v628
          %v632 = vunpack.c.l.s4 1934713408
          %v633 = vunpack.c.0.s8 %v632
          %v634 = vlaneseq
          %v635 = vshrl.u32 %v634, 7
          %v636 = vsub.s32 %v633, %v635
          %v637 = vrot.slane %v629, %v636
          %v639 = vunpack.c.l.s4 1934713408
          %v640 = vunpack.c.0.s8 %v639
          %v641 = vlaneseq
          %v642 = vshrl.u32 %v641, 7
          %v643 = vsub.s32 %v640, %v642
          %v644 = vrot.slane %v630, %v643
          %v645 = vcombine.high %v637, 0
          %v646 = vcombine.high %v644, 0
          %v649 = vunpack.c.l.s4 1983009808
          %v650 = vunpack.c.0.s8 %v649
          %v651 = vlaneseq
          %v652 = vshrl.u32 %v651, 7
          %v653 = vsub.s32 %v650, %v652
          %v654 = vrot.slane %v609, %v653
          %v657 = vunpack.c.l.s4 1983009808
          %v658 = vunpack.c.0.s8 %v657
          %v659 = vlaneseq
          %v660 = vshrl.u32 %v659, 7
          %v661 = vsub.s32 %v658, %v660
          %v662 = vrot.slane %v613, %v661
          %v663 = vcombine.low %v654, %v662
          %v664 = vcombine.high %v654, %v662
          %v666 = vunpack.c.l.s4 1934713408
          %v667 = vunpack.c.0.s8 %v666
          %v668 = vlaneseq
          %v669 = vshrl.u32 %v668, 7
          %v670 = vsub.s32 %v667, %v669
          %v671 = vrot.slane %v663, %v670
          %v673 = vunpack.c.l.s4 1934713408
          %v674 = vunpack.c.0.s8 %v673
          %v675 = vlaneseq
          %v676 = vshrl.u32 %v675, 7
          %v677 = vsub.s32 %v674, %v676
          %v678 = vrot.slane %v664, %v677
          %v679 = vcombine.high %v671, 0
          %v680 = vcombine.high %v678, 0
          %v683 = vpack.i.b16 %v671, %v637
          %v685 = vshrl.u32 %v637, 16
          %v686 = vshrl.u32 %v671, 16
          %v687 = vpack.i.b16 %v686, %v685
          %v691 = vpack.i.b16 %v679, %v645
          %v693 = vshrl.u32 %v645, 16
          %v694 = vshrl.u32 %v679, 16
          %v695 = vpack.i.b16 %v694, %v693
          %v699 = vpack.i.b16 %v678, %v644
          %v701 = vshrl.u32 %v644, 16
          %v702 = vshrl.u32 %v678, 16
          %v703 = vpack.i.b16 %v702, %v701
          %v707 = vpack.i.b16 %v680, %v646
          %v709 = vshrl.u32 %v646, 16
          %v710 = vshrl.u32 %v680, 16
          %v711 = vpack.i.b16 %v710, %v709
          %v713 = vcombine.low %v683, %v699
          %v715 = vunpack.c.l.s4 1983009808
          %v716 = vunpack.c.0.s8 %v715
          %v717 = vlaneseq
          %v718 = vshrl.u32 %v717, 7
          %v719 = vsub.s32 %v716, %v718
          %v720 = vrot.slane %v713, %v719
          %v721 = vcombine.low %v691, %v707
          %v723 = vunpack.c.l.s4 1983009808
          %v724 = vunpack.c.0.s8 %v723
          %v725 = vlaneseq
          %v726 = vshrl.u32 %v725, 7
          %v727 = vsub.s32 %v724, %v726
          %v728 = vrot.slane %v721, %v727
          %v729 = vcombine.low %v720, %v728
          %v731 = vunpack.c.l.s4 1934713408
          %v732 = vunpack.c.0.s8 %v731
          %v733 = vlaneseq
          %v734 = vshrl.u32 %v733, 7
          %v735 = vsub.s32 %v732, %v734
          %v736 = vrot.slane %v729, %v735
          %v737 = vcombine.high %v736, 0
          %v738 = vcombine.low %v687, %v703
          %v740 = vunpack.c.l.s4 1983009808
          %v741 = vunpack.c.0.s8 %v740
          %v742 = vlaneseq
          %v743 = vshrl.u32 %v742, 7
          %v744 = vsub.s32 %v741, %v743
          %v745 = vrot.slane %v738, %v744
          %v746 = vcombine.low %v695, %v711
          %v748 = vunpack.c.l.s4 1983009808
          %v749 = vunpack.c.0.s8 %v748
          %v750 = vlaneseq
          %v751 = vshrl.u32 %v750, 7
          %v752 = vsub.s32 %v749, %v751
          %v753 = vrot.slane %v746, %v752
          %v754 = vcombine.low %v745, %v753
          %v756 = vunpack.c.l.s4 1934713408
          %v757 = vunpack.c.0.s8 %v756
          %v758 = vlaneseq
          %v759 = vshrl.u32 %v758, 7
          %v760 = vsub.s32 %v757, %v759
          %v761 = vrot.slane %v754, %v760
          %v762 = vcombine.high %v761, 0
          %v765 = vpack.i.b16 %v761, %v736
          %v766 = vshrl.u32 %v736, 16
          %v767 = vshrl.u32 %v761, 16
          %v768 = vpack.i.b16 %v767, %v766
          %v771 = vpack.i.b16 %v762, %v737
          %v772 = vshrl.u32 %v737, 16
          %v773 = vshrl.u32 %v762, 16
          %v774 = vpack.i.b16 %v773, %v772
          %v775 = vpack.c.bf16 %v545, %v545
          %777 = vrot.lane.b32.xlu0 %v775, 120
          %v778 = vpop.permute.xlu0 %777
          %779 = vrot.lane.b32.xlu0 %v775, 112
          %v780 = vpop.permute.xlu0 %779
          %781 = vrot.lane.b32.xlu0 %v775, 104
          %v782 = vpop.permute.xlu0 %781
          %v784 = vunpack.c.l.s4 1983009808
          %v785 = vunpack.c.0.s8 %v784
          %v786 = vlaneseq
          %v787 = vshrl.u32 %v786, 7
          %v788 = vsub.s32 %v785, %v787
          %v789 = vrot.slane %v775, %v788
          %v792 = vunpack.c.l.s4 1983009808
          %v793 = vunpack.c.0.s8 %v792
          %v794 = vlaneseq
          %v795 = vshrl.u32 %v794, 7
          %v796 = vsub.s32 %v793, %v795
          %v797 = vrot.slane %v780, %v796
          %v798 = vcombine.low %v789, %v797
          %v799 = vcombine.high %v789, %v797
          %v801 = vunpack.c.l.s4 1934713408
          %v802 = vunpack.c.0.s8 %v801
          %v803 = vlaneseq
          %v804 = vshrl.u32 %v803, 7
          %v805 = vsub.s32 %v802, %v804
          %v806 = vrot.slane %v798, %v805
          %v808 = vunpack.c.l.s4 1934713408
          %v809 = vunpack.c.0.s8 %v808
          %v810 = vlaneseq
          %v811 = vshrl.u32 %v810, 7
          %v812 = vsub.s32 %v809, %v811
          %v813 = vrot.slane %v799, %v812
          %v814 = vcombine.high %v806, 0
          %v815 = vcombine.high %v813, 0
          %v818 = vunpack.c.l.s4 1983009808
          %v819 = vunpack.c.0.s8 %v818
          %v820 = vlaneseq
          %v821 = vshrl.u32 %v820, 7
          %v822 = vsub.s32 %v819, %v821
          %v823 = vrot.slane %v778, %v822
          %v826 = vunpack.c.l.s4 1983009808
          %v827 = vunpack.c.0.s8 %v826
          %v828 = vlaneseq
          %v829 = vshrl.u32 %v828, 7
          %v830 = vsub.s32 %v827, %v829
          %v831 = vrot.slane %v782, %v830
          %v832 = vcombine.low %v823, %v831
          %v833 = vcombine.high %v823, %v831
          %v835 = vunpack.c.l.s4 1934713408
          %v836 = vunpack.c.0.s8 %v835
          %v837 = vlaneseq
          %v838 = vshrl.u32 %v837, 7
          %v839 = vsub.s32 %v836, %v838
          %v840 = vrot.slane %v832, %v839
          %v842 = vunpack.c.l.s4 1934713408
          %v843 = vunpack.c.0.s8 %v842
          %v844 = vlaneseq
          %v845 = vshrl.u32 %v844, 7
          %v846 = vsub.s32 %v843, %v845
          %v847 = vrot.slane %v833, %v846
          %v848 = vcombine.high %v840, 0
          %v849 = vcombine.high %v847, 0
          %v852 = vpack.i.b16 %v840, %v806
          %v854 = vshrl.u32 %v806, 16
          %v855 = vshrl.u32 %v840, 16
          %v856 = vpack.i.b16 %v855, %v854
          %v860 = vpack.i.b16 %v848, %v814
          %v862 = vshrl.u32 %v814, 16
          %v863 = vshrl.u32 %v848, 16
          %v864 = vpack.i.b16 %v863, %v862
          %v868 = vpack.i.b16 %v847, %v813
          %v870 = vshrl.u32 %v813, 16
          %v871 = vshrl.u32 %v847, 16
          %v872 = vpack.i.b16 %v871, %v870
          %v876 = vpack.i.b16 %v849, %v815
          %v878 = vshrl.u32 %v815, 16
          %v879 = vshrl.u32 %v849, 16
          %v880 = vpack.i.b16 %v879, %v878
          %v882 = vcombine.low %v852, %v868
          %v884 = vunpack.c.l.s4 1983009808
          %v885 = vunpack.c.0.s8 %v884
          %v886 = vlaneseq
          %v887 = vshrl.u32 %v886, 7
          %v888 = vsub.s32 %v885, %v887
          %v889 = vrot.slane %v882, %v888
          %v890 = vcombine.low %v860, %v876
          %v892 = vunpack.c.l.s4 1983009808
          %v893 = vunpack.c.0.s8 %v892
          %v894 = vlaneseq
          %v895 = vshrl.u32 %v894, 7
          %v896 = vsub.s32 %v893, %v895
          %v897 = vrot.slane %v890, %v896
          %v898 = vcombine.low %v889, %v897
          %v900 = vunpack.c.l.s4 1934713408
          %v901 = vunpack.c.0.s8 %v900
          %v902 = vlaneseq
          %v903 = vshrl.u32 %v902, 7
          %v904 = vsub.s32 %v901, %v903
          %v905 = vrot.slane %v898, %v904
          %v906 = vcombine.high %v905, 0
          %v907 = vcombine.low %v856, %v872
          %v909 = vunpack.c.l.s4 1983009808
          %v910 = vunpack.c.0.s8 %v909
          %v911 = vlaneseq
          %v912 = vshrl.u32 %v911, 7
          %v913 = vsub.s32 %v910, %v912
          %v914 = vrot.slane %v907, %v913
          %v915 = vcombine.low %v864, %v880
          %v917 = vunpack.c.l.s4 1983009808
          %v918 = vunpack.c.0.s8 %v917
          %v919 = vlaneseq
          %v920 = vshrl.u32 %v919, 7
          %v921 = vsub.s32 %v918, %v920
          %v922 = vrot.slane %v915, %v921
          %v923 = vcombine.low %v914, %v922
          %v925 = vunpack.c.l.s4 1934713408
          %v926 = vunpack.c.0.s8 %v925
          %v927 = vlaneseq
          %v928 = vshrl.u32 %v927, 7
          %v929 = vsub.s32 %v926, %v928
          %v930 = vrot.slane %v923, %v929
          %v931 = vcombine.high %v930, 0
          %v934 = vpack.i.b16 %v930, %v905
          %v935 = vshrl.u32 %v905, 16
          %v936 = vshrl.u32 %v930, 16
          %v937 = vpack.i.b16 %v936, %v935
          %v940 = vpack.i.b16 %v931, %v906
          %v941 = vshrl.u32 %v906, 16
          %v942 = vshrl.u32 %v931, 16
          %v943 = vpack.i.b16 %v942, %v941
          %v944 = vpack.c.bf16 %v601, %v601
          %946 = vrot.lane.b32.xlu0 %v944, 120
          %v947 = vpop.permute.xlu0 %946
          %948 = vrot.lane.b32.xlu0 %v944, 112
          %v949 = vpop.permute.xlu0 %948
          %950 = vrot.lane.b32.xlu0 %v944, 104
          %v951 = vpop.permute.xlu0 %950
          %v953 = vunpack.c.l.s4 1983009808
          %v954 = vunpack.c.0.s8 %v953
          %v955 = vlaneseq
          %v956 = vshrl.u32 %v955, 7
          %v957 = vsub.s32 %v954, %v956
          %v958 = vrot.slane %v944, %v957
          %v961 = vunpack.c.l.s4 1983009808
          %v962 = vunpack.c.0.s8 %v961
          %v963 = vlaneseq
          %v964 = vshrl.u32 %v963, 7
          %v965 = vsub.s32 %v962, %v964
          %v966 = vrot.slane %v949, %v965
          %v967 = vcombine.low %v958, %v966
          %v968 = vcombine.high %v958, %v966
          %v970 = vunpack.c.l.s4 1934713408
          %v971 = vunpack.c.0.s8 %v970
          %v972 = vlaneseq
          %v973 = vshrl.u32 %v972, 7
          %v974 = vsub.s32 %v971, %v973
          %v975 = vrot.slane %v967, %v974
          %v977 = vunpack.c.l.s4 1934713408
          %v978 = vunpack.c.0.s8 %v977
          %v979 = vlaneseq
          %v980 = vshrl.u32 %v979, 7
          %v981 = vsub.s32 %v978, %v980
          %v982 = vrot.slane %v968, %v981
          %v983 = vcombine.high %v975, 0
          %v984 = vcombine.high %v982, 0
          %v987 = vunpack.c.l.s4 1983009808
          %v988 = vunpack.c.0.s8 %v987
          %v989 = vlaneseq
          %v990 = vshrl.u32 %v989, 7
          %v991 = vsub.s32 %v988, %v990
          %v992 = vrot.slane %v947, %v991
          %v995 = vunpack.c.l.s4 1983009808
          %v996 = vunpack.c.0.s8 %v995
          %v997 = vlaneseq
          %v998 = vshrl.u32 %v997, 7
          %v999 = vsub.s32 %v996, %v998
          %v1000 = vrot.slane %v951, %v999
          %v1001 = vcombine.low %v992, %v1000
          %v1002 = vcombine.high %v992, %v1000
          %v1004 = vunpack.c.l.s4 1934713408
          %v1005 = vunpack.c.0.s8 %v1004
          %v1006 = vlaneseq
          %v1007 = vshrl.u32 %v1006, 7
          %v1008 = vsub.s32 %v1005, %v1007
          %v1009 = vrot.slane %v1001, %v1008
          %v1011 = vunpack.c.l.s4 1934713408
          %v1012 = vunpack.c.0.s8 %v1011
          %v1013 = vlaneseq
          %v1014 = vshrl.u32 %v1013, 7
          %v1015 = vsub.s32 %v1012, %v1014
          %v1016 = vrot.slane %v1002, %v1015
          %v1017 = vcombine.high %v1009, 0
          %v1018 = vcombine.high %v1016, 0
          %v1021 = vpack.i.b16 %v1009, %v975
          %v1023 = vshrl.u32 %v975, 16
          %v1024 = vshrl.u32 %v1009, 16
          %v1025 = vpack.i.b16 %v1024, %v1023
          %v1029 = vpack.i.b16 %v1017, %v983
          %v1031 = vshrl.u32 %v983, 16
          %v1032 = vshrl.u32 %v1017, 16
          %v1033 = vpack.i.b16 %v1032, %v1031
          %v1037 = vpack.i.b16 %v1016, %v982
          %v1039 = vshrl.u32 %v982, 16
          %v1040 = vshrl.u32 %v1016, 16
          %v1041 = vpack.i.b16 %v1040, %v1039
          %v1045 = vpack.i.b16 %v1018, %v984
          %v1047 = vshrl.u32 %v984, 16
          %v1048 = vshrl.u32 %v1018, 16
          %v1049 = vpack.i.b16 %v1048, %v1047
          %v1051 = vcombine.low %v1021, %v1037
          %v1053 = vunpack.c.l.s4 1983009808
          %v1054 = vunpack.c.0.s8 %v1053
          %v1055 = vlaneseq
          %v1056 = vshrl.u32 %v1055, 7
          %v1057 = vsub.s32 %v1054, %v1056
          %v1058 = vrot.slane %v1051, %v1057
          %v1059 = vcombine.low %v1029, %v1045
          %v1061 = vunpack.c.l.s4 1983009808
          %v1062 = vunpack.c.0.s8 %v1061
          %v1063 = vlaneseq
          %v1064 = vshrl.u32 %v1063, 7
          %v1065 = vsub.s32 %v1062, %v1064
          %v1066 = vrot.slane %v1059, %v1065
          %v1067 = vcombine.low %v1058, %v1066
          %v1069 = vunpack.c.l.s4 1934713408
          %v1070 = vunpack.c.0.s8 %v1069
          %v1071 = vlaneseq
          %v1072 = vshrl.u32 %v1071, 7
          %v1073 = vsub.s32 %v1070, %v1072
          %v1074 = vrot.slane %v1067, %v1073
          %v1075 = vcombine.high %v1074, 0
          %v1076 = vcombine.low %v1025, %v1041
          %v1078 = vunpack.c.l.s4 1983009808
          %v1079 = vunpack.c.0.s8 %v1078
          %v1080 = vlaneseq
          %v1081 = vshrl.u32 %v1080, 7
          %v1082 = vsub.s32 %v1079, %v1081
          %v1083 = vrot.slane %v1076, %v1082
          %v1084 = vcombine.low %v1033, %v1049
          %v1086 = vunpack.c.l.s4 1983009808
          %v1087 = vunpack.c.0.s8 %v1086
          %v1088 = vlaneseq
          %v1089 = vshrl.u32 %v1088, 7
          %v1090 = vsub.s32 %v1087, %v1089
          %v1091 = vrot.slane %v1084, %v1090
          %v1092 = vcombine.low %v1083, %v1091
          %v1094 = vunpack.c.l.s4 1934713408
          %v1095 = vunpack.c.0.s8 %v1094
          %v1096 = vlaneseq
          %v1097 = vshrl.u32 %v1096, 7
          %v1098 = vsub.s32 %v1095, %v1097
          %v1099 = vrot.slane %v1092, %v1098
          %v1100 = vcombine.high %v1099, 0
          %v1103 = vpack.i.b16 %v1099, %v1074
          %v1104 = vshrl.u32 %v1074, 16
          %v1105 = vshrl.u32 %v1099, 16
          %v1106 = vpack.i.b16 %v1105, %v1104
          %v1109 = vpack.i.b16 %v1100, %v1075
          %v1110 = vshrl.u32 %v1075, 16
          %v1111 = vshrl.u32 %v1100, 16
          %v1112 = vpack.i.b16 %v1111, %v1110
          %vm1113 = vcmask 64512
          %v1115 = vsel %vm1113, %v765, 0
          %v1118 = vsel %vm1113, %v934, 0
          %1120 = vmatprep.subr.bf16.mxu0 0
          %1121 = vmatpush1.bf16.xpose.msra.mxu0 %v1118
          %1122 = vmatprep.subr.bf16.mxu0 0
          %1123 = vmatpush1.bf16.xpose.msra.mxu0 0
          %1124 = vmatprep.subr.bf16.mxu0 0
          %1125 = vmatpush1.bf16.xpose.msra.mxu0 0
          %1126 = vmatprep.subr.bf16.mxu0 0
          %1127 = vmatpush1.bf16.xpose.msra.mxu0 0
          %1128 = vmatprep.subr.bf16.mxu0 0
          %1129 = vmatpush1.bf16.xpose.msra.mxu0 0
          %1130 = vmatprep.subr.bf16.mxu0 0
          %1131 = vmatpush1.bf16.xpose.msra.mxu0 0
          %1132 = vmatprep.subr.bf16.mxu0 0
          %1133 = vmatpush1.bf16.xpose.msra.mxu0 0
          %1134 = vmatprep.subr.bf16.mxu0 0
          %1135 = vmatpush1.bf16.xpose.msra.mxu0 0
          %1136 = vmatprep.subr.bf16.mxu0 0
          %1137 = vmatpush1.bf16.xpose.msra.mxu0 0
          %1138 = vmatprep.subr.bf16.mxu0 0
          %1139 = vmatpush1.bf16.xpose.msra.mxu0 0
          %1140 = vmatprep.subr.bf16.mxu0 0
          %1141 = vmatpush1.bf16.xpose.msra.mxu0 0
          %1142 = vmatprep.subr.bf16.mxu0 0
          %1143 = vmatpush1.bf16.xpose.msra.mxu0 0
          %1144 = vmatprep.subr.bf16.mxu0 0
          %1145 = vmatpush1.bf16.xpose.msra.mxu0 0
          %1146 = vmatprep.subr.bf16.mxu0 0
          %1147 = vmatpush1.bf16.xpose.msra.mxu0 0
          %1148 = vmatprep.subr.bf16.mxu0 0
          %1149 = vmatpush1.bf16.xpose.msra.mxu0 0
          %1150 = vmatprep.subr.bf16.mxu0 0
          %1151 = vmatpush1.bf16.xpose.msra.mxu0 0
          %1152 = vmatprep.mubr.bf16.mxu0 0
          %1153 = vmatmul.mubr.bf16.gmra.mrb[0].mxu0 %v1115
          %v1154 = vpop.f32.mrb[0].mxu0
          %v1155 = vadd.f32 0.0, %v1154
          %v1156 = vpop.f32.mrb[0].mxu0
          %v1157 = vpop.f32.mrb[0].mxu0
          %v1158 = vpop.f32.mrb[0].mxu0
          %1159 = vdwg.mxu0
          %v1161 = vsel %vm1113, %v768, 0
          %v1164 = vsel %vm1113, %v937, 0
          %1166 = vmatprep.subr.bf16.mxu0 0
          %1167 = vmatpush1.bf16.xpose.msra.mxu0 %v1164
          %1168 = vmatprep.subr.bf16.mxu0 0
          %1169 = vmatpush1.bf16.xpose.msra.mxu0 0
          %1170 = vmatprep.subr.bf16.mxu0 0
          %1171 = vmatpush1.bf16.xpose.msra.mxu0 0
          %1172 = vmatprep.subr.bf16.mxu0 0
          %1173 = vmatpush1.bf16.xpose.msra.mxu0 0
          %1174 = vmatprep.subr.bf16.mxu0 0
          %1175 = vmatpush1.bf16.xpose.msra.mxu0 0
          %1176 = vmatprep.subr.bf16.mxu0 0
          %1177 = vmatpush1.bf16.xpose.msra.mxu0 0
          %1178 = vmatprep.subr.bf16.mxu0 0
          %1179 = vmatpush1.bf16.xpose.msra.mxu0 0
          %1180 = vmatprep.subr.bf16.mxu0 0
          %1181 = vmatpush1.bf16.xpose.msra.mxu0 0
          %1182 = vmatprep.subr.bf16.mxu0 0
          %1183 = vmatpush1.bf16.xpose.msra.mxu0 0
          %1184 = vmatprep.subr.bf16.mxu0 0
          %1185 = vmatpush1.bf16.xpose.msra.mxu0 0
          %1186 = vmatprep.subr.bf16.mxu0 0
          %1187 = vmatpush1.bf16.xpose.msra.mxu0 0
          %1188 = vmatprep.subr.bf16.mxu0 0
          %1189 = vmatpush1.bf16.xpose.msra.mxu0 0
          %1190 = vmatprep.subr.bf16.mxu0 0
          %1191 = vmatpush1.bf16.xpose.msra.mxu0 0
          %1192 = vmatprep.subr.bf16.mxu0 0
          %1193 = vmatpush1.bf16.xpose.msra.mxu0 0
          %1194 = vmatprep.subr.bf16.mxu0 0
          %1195 = vmatpush1.bf16.xpose.msra.mxu0 0
          %1196 = vmatprep.subr.bf16.mxu0 0
          %1197 = vmatpush1.bf16.xpose.msra.mxu0 0
          %1198 = vmatprep.mubr.bf16.mxu0 0
          %1199 = vmatmul.mubr.bf16.gmra.mrb[0].mxu0 %v1161
          %v1200 = vpop.f32.mrb[0].mxu0
          %v1201 = vadd.f32 0.0, %v1200
          %v1202 = vpop.f32.mrb[0].mxu0
          %v1203 = vpop.f32.mrb[0].mxu0
          %v1204 = vpop.f32.mrb[0].mxu0
          %1205 = vdwg.mxu0
          %v1207 = vsel %vm1113, %v771, 0
          %v1210 = vsel %vm1113, %v940, 0
          %1212 = vmatprep.subr.bf16.mxu0 0
          %1213 = vmatpush1.bf16.xpose.msra.mxu0 %v1210
          %1214 = vmatprep.subr.bf16.mxu0 0
          %1215 = vmatpush1.bf16.xpose.msra.mxu0 0
          %1216 = vmatprep.subr.bf16.mxu0 0
          %1217 = vmatpush1.bf16.xpose.msra.mxu0 0
          %1218 = vmatprep.subr.bf16.mxu0 0
          %1219 = vmatpush1.bf16.xpose.msra.mxu0 0
          %1220 = vmatprep.subr.bf16.mxu0 0
          %1221 = vmatpush1.bf16.xpose.msra.mxu0 0
          %1222 = vmatprep.subr.bf16.mxu0 0
          %1223 = vmatpush1.bf16.xpose.msra.mxu0 0
          %1224 = vmatprep.subr.bf16.mxu0 0
          %1225 = vmatpush1.bf16.xpose.msra.mxu0 0
          %1226 = vmatprep.subr.bf16.mxu0 0
          %1227 = vmatpush1.bf16.xpose.msra.mxu0 0
          %1228 = vmatprep.subr.bf16.mxu0 0
          %1229 = vmatpush1.bf16.xpose.msra.mxu0 0
          %1230 = vmatprep.subr.bf16.mxu0 0
          %1231 = vmatpush1.bf16.xpose.msra.mxu0 0
          %1232 = vmatprep.subr.bf16.mxu0 0
          %1233 = vmatpush1.bf16.xpose.msra.mxu0 0
          %1234 = vmatprep.subr.bf16.mxu0 0
          %1235 = vmatpush1.bf16.xpose.msra.mxu0 0
          %1236 = vmatprep.subr.bf16.mxu0 0
          %1237 = vmatpush1.bf16.xpose.msra.mxu0 0
          %1238 = vmatprep.subr.bf16.mxu0 0
          %1239 = vmatpush1.bf16.xpose.msra.mxu0 0
          %1240 = vmatprep.subr.bf16.mxu0 0
          %1241 = vmatpush1.bf16.xpose.msra.mxu0 0
          %1242 = vmatprep.subr.bf16.mxu0 0
          %1243 = vmatpush1.bf16.xpose.msra.mxu0 0
          %1244 = vmatprep.mubr.bf16.mxu0 0
          %1245 = vmatmul.mubr.bf16.gmra.mrb[0].mxu0 %v1207
          %v1246 = vpop.f32.mrb[0].mxu0
          %v1247 = vadd.f32 0.0, %v1246
          %v1248 = vpop.f32.mrb[0].mxu0
          %v1249 = vpop.f32.mrb[0].mxu0
          %v1250 = vpop.f32.mrb[0].mxu0
          %1251 = vdwg.mxu0
          %v1253 = vsel %vm1113, %v774, 0
          %v1256 = vsel %vm1113, %v943, 0
          %1258 = vmatprep.subr.bf16.mxu0 0
          %1259 = vmatpush1.bf16.xpose.msra.mxu0 %v1256
          %1260 = vmatprep.subr.bf16.mxu0 0
          %1261 = vmatpush1.bf16.xpose.msra.mxu0 0
          %1262 = vmatprep.subr.bf16.mxu0 0
          %1263 = vmatpush1.bf16.xpose.msra.mxu0 0
          %1264 = vmatprep.subr.bf16.mxu0 0
          %1265 = vmatpush1.bf16.xpose.msra.mxu0 0
          %1266 = vmatprep.subr.bf16.mxu0 0
          %1267 = vmatpush1.bf16.xpose.msra.mxu0 0
          %1268 = vmatprep.subr.bf16.mxu0 0
          %1269 = vmatpush1.bf16.xpose.msra.mxu0 0
          %1270 = vmatprep.subr.bf16.mxu0 0
          %1271 = vmatpush1.bf16.xpose.msra.mxu0 0
          %1272 = vmatprep.subr.bf16.mxu0 0
          %1273 = vmatpush1.bf16.xpose.msra.mxu0 0
          %1274 = vmatprep.subr.bf16.mxu0 0
          %1275 = vmatpush1.bf16.xpose.msra.mxu0 0
          %1276 = vmatprep.subr.bf16.mxu0 0
          %1277 = vmatpush1.bf16.xpose.msra.mxu0 0
          %1278 = vmatprep.subr.bf16.mxu0 0
          %1279 = vmatpush1.bf16.xpose.msra.mxu0 0
          %1280 = vmatprep.subr.bf16.mxu0 0
          %1281 = vmatpush1.bf16.xpose.msra.mxu0 0
          %1282 = vmatprep.subr.bf16.mxu0 0
          %1283 = vmatpush1.bf16.xpose.msra.mxu0 0
          %1284 = vmatprep.subr.bf16.mxu0 0
          %1285 = vmatpush1.bf16.xpose.msra.mxu0 0
          %1286 = vmatprep.subr.bf16.mxu0 0
          %1287 = vmatpush1.bf16.xpose.msra.mxu0 0
          %1288 = vmatprep.subr.bf16.mxu0 0
          %1289 = vmatpush1.bf16.xpose.msra.mxu0 0
          %1290 = vmatprep.mubr.bf16.mxu0 0
          %1291 = vmatmul.mubr.bf16.gmra.mrb[0].mxu0 %v1253
          %v1292 = vpop.f32.mrb[0].mxu0
          %v1293 = vadd.f32 0.0, %v1292
          %v1294 = vpop.f32.mrb[0].mxu0
          %v1295 = vpop.f32.mrb[0].mxu0
          %v1296 = vpop.f32.mrb[0].mxu0
          %1297 = vdwg.mxu0
          %s1298 = smul.u32 %s34, 8
          %v1299 = vlaneseq
          %v1300 = vshrl.u32 %v1299, 7
          %v1301 = vstv %s1298
          %v1302 = vadd.s32 %v1301, %v1300
          %v1303 = vlaneseq
          %v1304 = vand.u32 %v1303, 127
          %v1305 = vstv %s422
          %v1306 = vadd.s32 %v1305, %v1304
          %vm1307 = vcmp.le.s32.totalorder %v1306, %v1302
          %v1308 = vsel %vm1307, 1, 0
          %vm1309 = vcmp.eq.s32.totalorder %v1308, 1
          %v1310 = vsel %vm1309, %v1155, -1e+30
          %v1311 = vsel %vm1309, %v1201, -1e+30
          %v1312 = vsel %vm1309, %v1247, -1e+30
          %v1313 = vsel %vm1309, %v1293, -1e+30
          %v1314 = vld [vmem:[#allocation2] sm:$0xff]
          %v1315 = vld [vmem:[#allocation2 + $0x8] sm:$0xff]
          %v1316 = vld [vmem:[#allocation2 + $0x10] sm:$0xff]
          %v1317 = vld [vmem:[#allocation2 + $0x18] sm:$0xff]
          %v1318 = vsel %vm1113, %v1310, -inf
          %1319 = vmax.xlane.f32.xlu0 %v1318
          %v1320 = vpop.xlane.xlu0 %1319
          %v1321 = vsel %vm1113, %v1311, -inf
          %1322 = vmax.xlane.f32.xlu0 %v1321
          %v1323 = vpop.xlane.xlu0 %1322
          %v1324 = vsel %vm1113, %v1312, -inf
          %1325 = vmax.xlane.f32.xlu0 %v1324
          %v1326 = vpop.xlane.xlu0 %1325
          %v1327 = vsel %vm1113, %v1313, -inf
          %1328 = vmax.xlane.f32.xlu0 %v1327
          %v1329 = vpop.xlane.xlu0 %1328
          %v1330 = vmax.f32 %v1314, %v1320
          %v1331 = vmax.f32 %v1315, %v1323
          %v1332 = vmax.f32 %v1316, %v1326
          %v1333 = vmax.f32 %v1317, %v1329
          %v1334 = vsub.f32 %v1314, %v1330
          %v1335 = vsub.f32 %v1315, %v1331
          %v1336 = vsub.f32 %v1316, %v1332
          %v1337 = vsub.f32 %v1317, %v1333
          %v1338 = vmul.f32 %v1334, 1.442695
          %v1339 = vpow.pop %v1338
          %v1340 = vmul.f32 %v1335, 1.442695
          %v1341 = vpow.pop %v1340
          %v1342 = vmul.f32 %v1336, 1.442695
          %v1343 = vpow.pop %v1342
          %v1344 = vmul.f32 %v1337, 1.442695
          %v1345 = vpow.pop %v1344
          %1347 = vset.pattern.permute.xlu0 0
          %1348 = vperm.xlu0 %1347, %v1330
          %v1349 = vpop.permute.xlu0 %1348
          %1352 = vset.pattern.permute.xlu0 0
          %1353 = vperm.xlu0 %1352, %v1331
          %v1354 = vpop.permute.xlu0 %1353
          %1357 = vset.pattern.permute.xlu0 0
          %1358 = vperm.xlu0 %1357, %v1332
          %v1359 = vpop.permute.xlu0 %1358
          %1362 = vset.pattern.permute.xlu0 0
          %1363 = vperm.xlu0 %1362, %v1333
          %v1364 = vpop.permute.xlu0 %1363
          %v1366 = vsub.f32 %v1310, %v1349
          %v1367 = vsub.f32 %v1311, %v1354
          %v1368 = vsub.f32 %v1312, %v1359
          %v1369 = vsub.f32 %v1313, %v1364
          %v1370 = vmul.f32 %v1366, 1.442695
          %v1371 = vpow.pop %v1370
          %v1372 = vmul.f32 %v1367, 1.442695
          %v1373 = vpow.pop %v1372
          %v1374 = vmul.f32 %v1368, 1.442695
          %v1375 = vpow.pop %v1374
          %v1376 = vmul.f32 %v1369, 1.442695
          %v1377 = vpow.pop %v1376
          %v1378 = vld [vmem:[#allocation3] sm:$0xff]
          %v1379 = vld [vmem:[#allocation3 + $0x8] sm:$0xff]
          %v1380 = vld [vmem:[#allocation3 + $0x10] sm:$0xff]
          %v1381 = vld [vmem:[#allocation3 + $0x18] sm:$0xff]
          %v1382 = vmul.f32 %v1339, %v1378
          %v1383 = vmul.f32 %v1341, %v1379
          %v1384 = vmul.f32 %v1343, %v1380
          %v1385 = vmul.f32 %v1345, %v1381
          %v1386 = vsel %vm1113, %v1371, 0.0
          %1387 = vadd.xlane.f32.xlu0 %v1386
          %v1388 = vpop.xlane.xlu0 %1387
          %v1389 = vsel %vm1113, %v1373, 0.0
          %1390 = vadd.xlane.f32.xlu0 %v1389
          %v1391 = vpop.xlane.xlu0 %1390
          %v1392 = vsel %vm1113, %v1375, 0.0
          %1393 = vadd.xlane.f32.xlu0 %v1392
          %v1394 = vpop.xlane.xlu0 %1393
          %v1395 = vsel %vm1113, %v1377, 0.0
          %1396 = vadd.xlane.f32.xlu0 %v1395
          %v1397 = vpop.xlane.xlu0 %1396
          %v1398 = vadd.f32 %v1382, %v1388
          %v1399 = vadd.f32 %v1383, %v1391
          %v1400 = vadd.f32 %v1384, %v1394
          %v1401 = vadd.f32 %v1385, %v1397
          %vm1402 = vcmask 7168
          %1403 = vst.msk [vmem:[#allocation3] sm:$0xff] %vm1402, %v1398
          %1404 = vst.msk [vmem:[#allocation3 + $0x8] sm:$0xff] %vm1402, %v1399
          %1405 = vst.msk [vmem:[#allocation3 + $0x10] sm:$0xff] %vm1402, %v1400
          %1406 = vst.msk [vmem:[#allocation3 + $0x18] sm:$0xff] %vm1402, %v1401
          %v1407 = vpack.c.bf16 %v1371, %v1371
          %v1408 = vpack.c.bf16 %v1373, %v1373
          %v1409 = vpack.c.bf16 %v1375, %v1375
          %v1410 = vpack.c.bf16 %v1377, %v1377
          %v1412 = vsel %vm1113, %v1407, 0
          %vm1414 = vcmask 1043456
          %v1416 = vsel %vm1414, %v1103, 0
          %1418 = vmatprep.subr.bf16.mxu0 0
          %1419 = vmatpush1.bf16.msra.mxu0 %v1416
          %1420 = vmatprep.subr.bf16.mxu0 0
          %1421 = vmatpush1.bf16.msra.mxu0 0
          %1422 = vmatprep.subr.bf16.mxu0 0
          %1423 = vmatpush1.bf16.msra.mxu0 0
          %1424 = vmatprep.subr.bf16.mxu0 0
          %1425 = vmatpush1.bf16.msra.mxu0 0
          %1426 = vmatprep.subr.bf16.mxu0 0
          %1427 = vmatpush1.bf16.msra.mxu0 0
          %1428 = vmatprep.subr.bf16.mxu0 0
          %1429 = vmatpush1.bf16.msra.mxu0 0
          %1430 = vmatprep.subr.bf16.mxu0 0
          %1431 = vmatpush1.bf16.msra.mxu0 0
          %1432 = vmatprep.subr.bf16.mxu0 0
          %1433 = vmatpush1.bf16.msra.mxu0 0
          %1434 = vmatprep.subr.bf16.mxu0 0
          %1435 = vmatpush1.bf16.msra.mxu0 0
          %1436 = vmatprep.subr.bf16.mxu0 0
          %1437 = vmatpush1.bf16.msra.mxu0 0
          %1438 = vmatprep.subr.bf16.mxu0 0
          %1439 = vmatpush1.bf16.msra.mxu0 0
          %1440 = vmatprep.subr.bf16.mxu0 0
          %1441 = vmatpush1.bf16.msra.mxu0 0
          %1442 = vmatprep.subr.bf16.mxu0 0
          %1443 = vmatpush1.bf16.msra.mxu0 0
          %1444 = vmatprep.subr.bf16.mxu0 0
          %1445 = vmatpush1.bf16.msra.mxu0 0
          %1446 = vmatprep.subr.bf16.mxu0 0
          %1447 = vmatpush1.bf16.msra.mxu0 0
          %1448 = vmatprep.subr.bf16.mxu0 0
          %1449 = vmatpush1.bf16.msra.mxu0 0
          %1450 = vmatprep.mubr.bf16.mxu0 0
          %1451 = vmatmul.mubr.bf16.gmra.mrb[0].mxu0 %v1412
          %v1452 = vpop.f32.mrb[0].mxu0
          %v1453 = vadd.f32 0.0, %v1452
          %v1454 = vpop.f32.mrb[0].mxu0
          %v1455 = vpop.f32.mrb[0].mxu0
          %v1456 = vpop.f32.mrb[0].mxu0
          %1457 = vdwg.mxu0
          %v1459 = vsel %vm1113, %v1408, 0
          %v1462 = vsel %vm1414, %v1106, 0
          %1464 = vmatprep.subr.bf16.mxu0 0
          %1465 = vmatpush1.bf16.msra.mxu0 %v1462
          %1466 = vmatprep.subr.bf16.mxu0 0
          %1467 = vmatpush1.bf16.msra.mxu0 0
          %1468 = vmatprep.subr.bf16.mxu0 0
          %1469 = vmatpush1.bf16.msra.mxu0 0
          %1470 = vmatprep.subr.bf16.mxu0 0
          %1471 = vmatpush1.bf16.msra.mxu0 0
          %1472 = vmatprep.subr.bf16.mxu0 0
          %1473 = vmatpush1.bf16.msra.mxu0 0
          %1474 = vmatprep.subr.bf16.mxu0 0
          %1475 = vmatpush1.bf16.msra.mxu0 0
          %1476 = vmatprep.subr.bf16.mxu0 0
          %1477 = vmatpush1.bf16.msra.mxu0 0
          %1478 = vmatprep.subr.bf16.mxu0 0
          %1479 = vmatpush1.bf16.msra.mxu0 0
          %1480 = vmatprep.subr.bf16.mxu0 0
          %1481 = vmatpush1.bf16.msra.mxu0 0
          %1482 = vmatprep.subr.bf16.mxu0 0
          %1483 = vmatpush1.bf16.msra.mxu0 0
          %1484 = vmatprep.subr.bf16.mxu0 0
          %1485 = vmatpush1.bf16.msra.mxu0 0
          %1486 = vmatprep.subr.bf16.mxu0 0
          %1487 = vmatpush1.bf16.msra.mxu0 0
          %1488 = vmatprep.subr.bf16.mxu0 0
          %1489 = vmatpush1.bf16.msra.mxu0 0
          %1490 = vmatprep.subr.bf16.mxu0 0
          %1491 = vmatpush1.bf16.msra.mxu0 0
          %1492 = vmatprep.subr.bf16.mxu0 0
          %1493 = vmatpush1.bf16.msra.mxu0 0
          %1494 = vmatprep.subr.bf16.mxu0 0
          %1495 = vmatpush1.bf16.msra.mxu0 0
          %1496 = vmatprep.mubr.bf16.mxu0 0
          %1497 = vmatmul.mubr.bf16.gmra.mrb[0].mxu0 %v1459
          %v1498 = vpop.f32.mrb[0].mxu0
          %v1499 = vadd.f32 0.0, %v1498
          %v1500 = vpop.f32.mrb[0].mxu0
          %v1501 = vpop.f32.mrb[0].mxu0
          %v1502 = vpop.f32.mrb[0].mxu0
          %1503 = vdwg.mxu0
          %v1505 = vsel %vm1113, %v1409, 0
          %v1508 = vsel %vm1414, %v1109, 0
          %1510 = vmatprep.subr.bf16.mxu0 0
          %1511 = vmatpush1.bf16.msra.mxu0 %v1508
          %1512 = vmatprep.subr.bf16.mxu0 0
          %1513 = vmatpush1.bf16.msra.mxu0 0
          %1514 = vmatprep.subr.bf16.mxu0 0
          %1515 = vmatpush1.bf16.msra.mxu0 0
          %1516 = vmatprep.subr.bf16.mxu0 0
          %1517 = vmatpush1.bf16.msra.mxu0 0
          %1518 = vmatprep.subr.bf16.mxu0 0
          %1519 = vmatpush1.bf16.msra.mxu0 0
          %1520 = vmatprep.subr.bf16.mxu0 0
          %1521 = vmatpush1.bf16.msra.mxu0 0
          %1522 = vmatprep.subr.bf16.mxu0 0
          %1523 = vmatpush1.bf16.msra.mxu0 0
          %1524 = vmatprep.subr.bf16.mxu0 0
          %1525 = vmatpush1.bf16.msra.mxu0 0
          %1526 = vmatprep.subr.bf16.mxu0 0
          %1527 = vmatpush1.bf16.msra.mxu0 0
          %1528 = vmatprep.subr.bf16.mxu0 0
          %1529 = vmatpush1.bf16.msra.mxu0 0
          %1530 = vmatprep.subr.bf16.mxu0 0
          %1531 = vmatpush1.bf16.msra.mxu0 0
          %1532 = vmatprep.subr.bf16.mxu0 0
          %1533 = vmatpush1.bf16.msra.mxu0 0
          %1534 = vmatprep.subr.bf16.mxu0 0
          %1535 = vmatpush1.bf16.msra.mxu0 0
          %1536 = vmatprep.subr.bf16.mxu0 0
          %1537 = vmatpush1.bf16.msra.mxu0 0
          %1538 = vmatprep.subr.bf16.mxu0 0
          %1539 = vmatpush1.bf16.msra.mxu0 0
          %1540 = vmatprep.subr.bf16.mxu0 0
          %1541 = vmatpush1.bf16.msra.mxu0 0
          %1542 = vmatprep.mubr.bf16.mxu0 0
          %1543 = vmatmul.mubr.bf16.gmra.mrb[0].mxu0 %v1505
          %v1544 = vpop.f32.mrb[0].mxu0
          %v1545 = vadd.f32 0.0, %v1544
          %v1546 = vpop.f32.mrb[0].mxu0
          %v1547 = vpop.f32.mrb[0].mxu0
          %v1548 = vpop.f32.mrb[0].mxu0
          %1549 = vdwg.mxu0
          %v1551 = vsel %vm1113, %v1410, 0
          %v1554 = vsel %vm1414, %v1112, 0
          %1556 = vmatprep.subr.bf16.mxu0 0
          %1557 = vmatpush1.bf16.msra.mxu0 %v1554
          %1558 = vmatprep.subr.bf16.mxu0 0
          %1559 = vmatpush1.bf16.msra.mxu0 0
          %1560 = vmatprep.subr.bf16.mxu0 0
          %1561 = vmatpush1.bf16.msra.mxu0 0
          %1562 = vmatprep.subr.bf16.mxu0 0
          %1563 = vmatpush1.bf16.msra.mxu0 0
          %1564 = vmatprep.subr.bf16.mxu0 0
          %1565 = vmatpush1.bf16.msra.mxu0 0
          %1566 = vmatprep.subr.bf16.mxu0 0
          %1567 = vmatpush1.bf16.msra.mxu0 0
          %1568 = vmatprep.subr.bf16.mxu0 0
          %1569 = vmatpush1.bf16.msra.mxu0 0
          %1570 = vmatprep.subr.bf16.mxu0 0
          %1571 = vmatpush1.bf16.msra.mxu0 0
          %1572 = vmatprep.subr.bf16.mxu0 0
          %1573 = vmatpush1.bf16.msra.mxu0 0
          %1574 = vmatprep.subr.bf16.mxu0 0
          %1575 = vmatpush1.bf16.msra.mxu0 0
          %1576 = vmatprep.subr.bf16.mxu0 0
          %1577 = vmatpush1.bf16.msra.mxu0 0
          %1578 = vmatprep.subr.bf16.mxu0 0
          %1579 = vmatpush1.bf16.msra.mxu0 0
          %1580 = vmatprep.subr.bf16.mxu0 0
          %1581 = vmatpush1.bf16.msra.mxu0 0
          %1582 = vmatprep.subr.bf16.mxu0 0
          %1583 = vmatpush1.bf16.msra.mxu0 0
          %1584 = vmatprep.subr.bf16.mxu0 0
          %1585 = vmatpush1.bf16.msra.mxu0 0
          %1586 = vmatprep.subr.bf16.mxu0 0
          %1587 = vmatpush1.bf16.msra.mxu0 0
          %1588 = vmatprep.mubr.bf16.mxu0 0
          %1589 = vmatmul.mubr.bf16.gmra.mrb[0].mxu0 %v1551
          %v1590 = vpop.f32.mrb[0].mxu0
          %v1591 = vadd.f32 0.0, %v1590
          %v1592 = vpop.f32.mrb[0].mxu0
          %v1593 = vpop.f32.mrb[0].mxu0
          %v1594 = vpop.f32.mrb[0].mxu0
          %1595 = vdwg.mxu0
          %v1596 = vld [vmem:[#allocation4] sm:$0xff]
          %v1597 = vld [vmem:[#allocation4 + $0x8] sm:$0xff]
          %v1598 = vld [vmem:[#allocation4 + $0x10] sm:$0xff]
          %v1599 = vld [vmem:[#allocation4 + $0x18] sm:$0xff]
          %1601 = vset.pattern.permute.xlu0 0
          %1602 = vperm.xlu0 %1601, %v1339
          %v1603 = vpop.permute.xlu0 %1602
          %1606 = vset.pattern.permute.xlu0 0
          %1607 = vperm.xlu0 %1606, %v1341
          %v1608 = vpop.permute.xlu0 %1607
          %1611 = vset.pattern.permute.xlu0 0
          %1612 = vperm.xlu0 %1611, %v1343
          %v1613 = vpop.permute.xlu0 %1612
          %1616 = vset.pattern.permute.xlu0 0
          %1617 = vperm.xlu0 %1616, %v1345
          %v1618 = vpop.permute.xlu0 %1617
          %v1620 = vmul.f32 %v1603, %v1596
          %v1621 = vmul.f32 %v1608, %v1597
          %v1622 = vmul.f32 %v1613, %v1598
          %v1623 = vmul.f32 %v1618, %v1599
          %v1624 = vadd.f32 %v1620, %v1453
          %v1625 = vadd.f32 %v1621, %v1499
          %v1626 = vadd.f32 %v1622, %v1545
          %v1627 = vadd.f32 %v1623, %v1591
          %1628 = vst.msk [vmem:[#allocation4] sm:$0xff] %vm1113, %v1624
          %1629 = vst.msk [vmem:[#allocation4 + $0x8] sm:$0xff] %vm1113, %v1625
          %1630 = vst.msk [vmem:[#allocation4 + $0x10] sm:$0xff] %vm1113, %v1626
          %1631 = vst.msk [vmem:[#allocation4 + $0x18] sm:$0xff] %vm1113, %v1627
          %1632 = vst.msk [vmem:[#allocation2] sm:$0xff] %vm1402, %v1330
          %1633 = vst.msk [vmem:[#allocation2 + $0x8] sm:$0xff] %vm1402, %v1331
          %1634 = vst.msk [vmem:[#allocation2 + $0x10] sm:$0xff] %vm1402, %v1332
          %1635 = vst.msk [vmem:[#allocation2 + $0x18] sm:$0xff] %vm1402, %v1333
        $region76: #{tpu_custom_call.1} parent=47 // pred_fallthru
          _
        %p1636 = scmp.eq.s32.totalorder %s35, 1
        // Predicated region
        $region77: #{tpu_custom_call.1} parent=47 // pred_check
          %p1637 = pneg %p1636
        $region78: #{tpu_custom_call.1} parent=47 // pred_check_branch
          %1639 = sbr.rel (%p1637) target = $region80
        $region79: #{tpu_custom_call.1} parent=47 // pred_region
          %v1640 = vld [vmem:[#allocation3] sm:$0xff]
          %v1641 = vld [vmem:[#allocation3 + $0x8] sm:$0xff]
          %v1642 = vld [vmem:[#allocation3 + $0x10] sm:$0xff]
          %v1643 = vld [vmem:[#allocation3 + $0x18] sm:$0xff]
          %v1644 = vrcp.pop %v1640
          %v1645 = vrcp.pop %v1641
          %v1646 = vrcp.pop %v1642
          %v1647 = vrcp.pop %v1643
          %v1648 = vld [vmem:[#allocation4] sm:$0xff]
          %v1649 = vld [vmem:[#allocation4 + $0x8] sm:$0xff]
          %v1650 = vld [vmem:[#allocation4 + $0x10] sm:$0xff]
          %v1651 = vld [vmem:[#allocation4 + $0x18] sm:$0xff]
          %1653 = vset.pattern.permute.xlu0 0
          %1654 = vperm.xlu0 %1653, %v1644
          %v1655 = vpop.permute.xlu0 %1654
          %1658 = vset.pattern.permute.xlu0 0
          %1659 = vperm.xlu0 %1658, %v1645
          %v1660 = vpop.permute.xlu0 %1659
          %1663 = vset.pattern.permute.xlu0 0
          %1664 = vperm.xlu0 %1663, %v1646
          %v1665 = vpop.permute.xlu0 %1664
          %1668 = vset.pattern.permute.xlu0 0
          %1669 = vperm.xlu0 %1668, %v1647
          %v1670 = vpop.permute.xlu0 %1669
          %v1672 = vmul.f32 %v1648, %v1655
          %v1673 = vmul.f32 %v1649, %v1660
          %v1674 = vmul.f32 %v1650, %v1665
          %v1675 = vmul.f32 %v1651, %v1670
          %v1676 = vcombine.low %v1672, %v1674
          %v1677 = vcombine.high %v1672, %v1674
          %v1679 = vunpack.c.l.s4 1983009808
          %v1680 = vunpack.c.0.s8 %v1679
          %v1681 = vlaneseq
          %v1682 = vshrl.u32 %v1681, 7
          %v1683 = vsub.s32 %v1680, %v1682
          %v1684 = vrot.slane %v1676, %v1683
          %v1686 = vunpack.c.l.s4 1983009808
          %v1687 = vunpack.c.0.s8 %v1686
          %v1688 = vlaneseq
          %v1689 = vshrl.u32 %v1688, 7
          %v1690 = vsub.s32 %v1687, %v1689
          %v1691 = vrot.slane %v1677, %v1690
          %v1692 = vcombine.low %v1673, %v1675
          %v1693 = vcombine.high %v1673, %v1675
          %v1695 = vunpack.c.l.s4 1983009808
          %v1696 = vunpack.c.0.s8 %v1695
          %v1697 = vlaneseq
          %v1698 = vshrl.u32 %v1697, 7
          %v1699 = vsub.s32 %v1696, %v1698
          %v1700 = vrot.slane %v1692, %v1699
          %v1702 = vunpack.c.l.s4 1983009808
          %v1703 = vunpack.c.0.s8 %v1702
          %v1704 = vlaneseq
          %v1705 = vshrl.u32 %v1704, 7
          %v1706 = vsub.s32 %v1703, %v1705
          %v1707 = vrot.slane %v1693, %v1706
          %v1708 = vcombine.low %v1684, %v1700
          %v1709 = vcombine.high %v1684, %v1700
          %v1711 = vunpack.c.l.s4 1934713408
          %v1712 = vunpack.c.0.s8 %v1711
          %v1713 = vlaneseq
          %v1714 = vshrl.u32 %v1713, 7
          %v1715 = vsub.s32 %v1712, %v1714
          %v1716 = vrot.slane %v1708, %v1715
          %v1718 = vunpack.c.l.s4 1934713408
          %v1719 = vunpack.c.0.s8 %v1718
          %v1720 = vlaneseq
          %v1721 = vshrl.u32 %v1720, 7
          %v1722 = vsub.s32 %v1719, %v1721
          %v1723 = vrot.slane %v1709, %v1722
          %v1724 = vcombine.low %v1691, %v1707
          %v1725 = vcombine.high %v1691, %v1707
          %v1727 = vunpack.c.l.s4 1934713408
          %v1728 = vunpack.c.0.s8 %v1727
          %v1729 = vlaneseq
          %v1730 = vshrl.u32 %v1729, 7
          %v1731 = vsub.s32 %v1728, %v1730
          %v1732 = vrot.slane %v1724, %v1731
          %v1734 = vunpack.c.l.s4 1934713408
          %v1735 = vunpack.c.0.s8 %v1734
          %v1736 = vlaneseq
          %v1737 = vshrl.u32 %v1736, 7
          %v1738 = vsub.s32 %v1735, %v1737
          %v1739 = vrot.slane %v1725, %v1738
          %v1740 = vcombine.high %v1716, 0.0
          %v1741 = vcombine.high %v1723, 0.0
          %v1742 = vcombine.high %v1732, 0.0
          %v1743 = vcombine.high %v1739, 0.0
          %v1744 = vcombine.low %v1716, %v1723
          %v1746 = vunpack.c.l.s4 1983009808
          %v1747 = vunpack.c.0.s8 %v1746
          %v1748 = vlaneseq
          %v1749 = vshrl.u32 %v1748, 7
          %v1750 = vsub.s32 %v1747, %v1749
          %v1751 = vrot.slane %v1744, %v1750
          %v1752 = vcombine.low %v1740, %v1741
          %v1754 = vunpack.c.l.s4 1983009808
          %v1755 = vunpack.c.0.s8 %v1754
          %v1756 = vlaneseq
          %v1757 = vshrl.u32 %v1756, 7
          %v1758 = vsub.s32 %v1755, %v1757
          %v1759 = vrot.slane %v1752, %v1758
          %v1760 = vcombine.low %v1732, %v1739
          %v1762 = vunpack.c.l.s4 1983009808
          %v1763 = vunpack.c.0.s8 %v1762
          %v1764 = vlaneseq
          %v1765 = vshrl.u32 %v1764, 7
          %v1766 = vsub.s32 %v1763, %v1765
          %v1767 = vrot.slane %v1760, %v1766
          %v1768 = vcombine.low %v1742, %v1743
          %v1770 = vunpack.c.l.s4 1983009808
          %v1771 = vunpack.c.0.s8 %v1770
          %v1772 = vlaneseq
          %v1773 = vshrl.u32 %v1772, 7
          %v1774 = vsub.s32 %v1771, %v1773
          %v1775 = vrot.slane %v1768, %v1774
          %v1776 = vcombine.low %v1751, %v1759
          %v1777 = vcombine.high %v1751, %v1759
          %v1779 = vunpack.c.l.s4 1934713408
          %v1780 = vunpack.c.0.s8 %v1779
          %v1781 = vlaneseq
          %v1782 = vshrl.u32 %v1781, 7
          %v1783 = vsub.s32 %v1780, %v1782
          %v1784 = vrot.slane %v1776, %v1783
          %v1786 = vunpack.c.l.s4 1934713408
          %v1787 = vunpack.c.0.s8 %v1786
          %v1788 = vlaneseq
          %v1789 = vshrl.u32 %v1788, 7
          %v1790 = vsub.s32 %v1787, %v1789
          %v1791 = vrot.slane %v1777, %v1790
          %v1792 = vcombine.low %v1767, %v1775
          %v1793 = vcombine.high %v1767, %v1775
          %v1795 = vunpack.c.l.s4 1934713408
          %v1796 = vunpack.c.0.s8 %v1795
          %v1797 = vlaneseq
          %v1798 = vshrl.u32 %v1797, 7
          %v1799 = vsub.s32 %v1796, %v1798
          %v1800 = vrot.slane %v1792, %v1799
          %v1802 = vunpack.c.l.s4 1934713408
          %v1803 = vunpack.c.0.s8 %v1802
          %v1804 = vlaneseq
          %v1805 = vshrl.u32 %v1804, 7
          %v1806 = vsub.s32 %v1803, %v1805
          %v1807 = vrot.slane %v1793, %v1806
          %v1808 = vcombine.low %v1784, %v1800
          %v1809 = vcombine.high %v1784, %v1800
          %v1810 = vcombine.low %v1791, %v1807
          %v1811 = vcombine.high %v1791, %v1807
          %1813 = vrot.lane.b32.xlu0 %v1809, 8
          %v1814 = vpop.permute.xlu0 %1813
          %1817 = vrot.lane.b32.xlu0 %v1810, 16
          %v1818 = vpop.permute.xlu0 %1817
          %1821 = vrot.lane.b32.xlu0 %v1811, 24
          %v1822 = vpop.permute.xlu0 %1821
          %vm1824 = vcmask 64512
          %v1825 = vsel %vm1824, %v1808, %v1814
          %vm1826 = vcmask 130048
          %v1827 = vsel %vm1826, %v1825, %v1818
          %vm1828 = vcmask 195584
          %v1829 = vsel %vm1828, %v1827, %v1822
          %v1830 = vpack.c.bf16 %v1829, %v1829
          %v1831 = vld [vmem:[%s5] sm:$0xf]
          %v1832 = vld [vmem:[%s5 + $0x4] sm:$0xf]
          %v1833 = vld [vmem:[%s5 + $0x8] sm:$0xf]
          %v1834 = vld [vmem:[%s5 + $0xc] sm:$0xf]
          %v1835 = vld [vmem:[%s6] sm:$0x1]
          %v1837 = vlaneseq
          %v1838 = vshrl.u32 %v1837, 7
          %v1839 = vsub.s32 0, %v1838
          %v1840 = vrot.slane %v1835, %v1839
          %v1846 = vunpack.c.l.b16 %v1831
          %v1847 = vunpack.c.l.b16 %v1832
          %v1848 = vunpack.c.l.b16 %v1833
          %v1849 = vunpack.c.l.b16 %v1834
          %v1850 = vpack.c.b16 %v1847, %v1846
          %v1851 = vpack.c.b16 %v1849, %v1848
          %vm1854 = vcmask 261120
          %v1856 = vsel %vm1854, %v1830, 0
          %1858 = vmatprep.subr.bf16.mxu0 0
          %1859 = vmatpush1.bf16.msra.mxu0 %v1850
          %1860 = vmatprep.subr.bf16.mxu0 0
          %1861 = vmatpush1.bf16.msra.mxu0 %v1851
          %1862 = vmatprep.subr.bf16.mxu0 0
          %1863 = vmatpush1.bf16.msra.mxu0 0
          %1864 = vmatprep.subr.bf16.mxu0 0
          %1865 = vmatpush1.bf16.msra.mxu0 0
          %1866 = vmatprep.subr.bf16.mxu0 0
          %1867 = vmatpush1.bf16.msra.mxu0 0
          %1868 = vmatprep.subr.bf16.mxu0 0
          %1869 = vmatpush1.bf16.msra.mxu0 0
          %1870 = vmatprep.subr.bf16.mxu0 0
          %1871 = vmatpush1.bf16.msra.mxu0 0
          %1872 = vmatprep.subr.bf16.mxu0 0
          %1873 = vmatpush1.bf16.msra.mxu0 0
          %1874 = vmatprep.subr.bf16.mxu0 0
          %1875 = vmatpush1.bf16.msra.mxu0 0
          %1876 = vmatprep.subr.bf16.mxu0 0
          %1877 = vmatpush1.bf16.msra.mxu0 0
          %1878 = vmatprep.subr.bf16.mxu0 0
          %1879 = vmatpush1.bf16.msra.mxu0 0
          %1880 = vmatprep.subr.bf16.mxu0 0
          %1881 = vmatpush1.bf16.msra.mxu0 0
          %1882 = vmatprep.subr.bf16.mxu0 0
          %1883 = vmatpush1.bf16.msra.mxu0 0
          %1884 = vmatprep.subr.bf16.mxu0 0
          %1885 = vmatpush1.bf16.msra.mxu0 0
          %1886 = vmatprep.subr.bf16.mxu0 0
          %1887 = vmatpush1.bf16.msra.mxu0 0
          %1888 = vmatprep.subr.bf16.mxu0 0
          %1889 = vmatpush1.bf16.msra.mxu0 0
          %1890 = vmatprep.mubr.bf16.mxu0 0
          %1891 = vmatmul.mubr.bf16.gmra.mrb[0].mxu0 %v1856
          %v1892 = vpop.f32.mrb[0].mxu0
          %v1893 = vadd.f32 %v1840, %v1892
          %v1894 = vpop.f32.mrb[0].mxu0
          %v1895 = vpop.f32.mrb[0].mxu0
          %v1896 = vpop.f32.mrb[0].mxu0
          %1897 = vdwg.mxu0
          %1898 = vst.msk [vmem:[%s402] sm:$0xff] %vm1854, %v1893
        $region80: #{tpu_custom_call.1} parent=47 // pred_fallthru
          _
        %s1899 = sand.u32 %s218, 1
        %s1900 = scalar_lea.sflag [#allocation7], %s1899
        %s1901 = sand.u32 %s218, 1
        %s1902 = smul.addr %s1901, 8
        %s1903 = scalar_lea.vmem [#allocation14], %s1902
        // Predicated region
        $region81: #{tpu_custom_call.1} parent=47 // pred_check
          %p1904 = pneg %p228
        $region82: #{tpu_custom_call.1} parent=47 // pred_check_branch
          %1906 = sbr.rel (%p1904) target = $region84
        $region83: #{tpu_custom_call.1} parent=47 // pred_region
          %s1908 = ssub.s32 128, 128
          %1909 = vsyncadd %s1900, %s1908
          %s1910 = smul.addr %s33, 2
          %s1911 = sadd.s32 %s34, %s1910
          %s1912 = smul.addr %s1911, 128
          %s1913 = scalar_lea.hbm %s7, %s1912
          %s1915 = sshll.u32 %s1903, 4
          %s1916 = int_to_ptr.vmem [resolvable:$true] %s1915
          %1918 = dma.vmem_to_hbm [thread:$0]  %s1916, 128, %s1913, %s1900
        $region84: #{tpu_custom_call.1} parent=47 // pred_fallthru
          _
      $region48: #{tpu_custom_call.1} parent=5 // pred_fallthru
        _
      %p1919 = scmp.le.s32.totalorder 2, %s23
      // Predicated region
      $region85: #{tpu_custom_call.1} parent=5 // pred_check
        %p1920 = pneg %p1919
      $region86: #{tpu_custom_call.1} parent=5 // pred_check_branch
        %1922 = sbr.rel (%p1920) target = $region88
      $region87: #{tpu_custom_call.1} parent=5 // pred_region
        %s1923 = ssub.s32 %s23, 2
        // Predicated region
        $region89: #{tpu_custom_call.1} parent=87 // pred_check
          %p1924 = pneg %p234
        $region90: #{tpu_custom_call.1} parent=87 // pred_check_branch
          %1926 = sbr.rel (%p1924) target = $region92
        $region91: #{tpu_custom_call.1} parent=87 // pred_region
          %s1927 = sand.u32 %s219, 1
          %s1928 = scalar_lea.sflag [#allocation7], %s1927
          %s1929 = sand.u32 %s219, 1
          %s1930 = smul.addr %s1929, 8
          %s1931 = scalar_lea.vmem [#allocation14], %s1930
          %1932 = dma.done %s1928, 128
        $region92: #{tpu_custom_call.1} parent=87 // pred_fallthru
          _
      $region88: #{tpu_custom_call.1} parent=5 // pred_fallthru
        _
    $region6: #{tpu_custom_call.1} parent=1 // loop_footer
      %s27 = sadd.s32 1, %s23
    $region7: #{tpu_custom_call.1} parent=1 // loop_footer_branch
      %22 = sbr.rel target = $region3
    $region8: #{tpu_custom_call.1} parent=1 // loop_exit
      _
    %1933 = vsyncpa [#allocation6], 1
    %s1934 = scalar_lea.sflag [#allocation6], 1
    %1935 = vsyncpa %s1934, 1
    %1936 = vsyncpa [#allocation9], 1
    %s1937 = scalar_lea.sflag [#allocation9], 1
    %1938 = vsyncpa %s1937, 1
    %1939 = vsyncpa [#allocation12], 1
    %1940 = vsyncpa [#allocation7], 1
    %s1941 = scalar_lea.sflag [#allocation7], 1
    %1942 = vsyncpa %s1941, 1

</llo_original>
